<compile_context>
chip_gen: v6e
topology: v6e:2x2x1
jax: 0.10.0
libtpu: 0.0.40
codegen_flags: <defaults>
</compile_context>

<pallas_src>
import functools

import jax
import jax.numpy as jnp
from jax import lax
from jax.experimental import pallas as pl
from jax.experimental.pallas import tpu as pltpu

H1, H2 = 512, 32        # hidden sizes fixed by the module definition
NEG = -1e30             # mask sentinel; far below any reachable logit
_SERIAL_K_LIMIT = 8     # switch point: serial extraction vs threshold top-k
_ROWS = 8               # batches per grid step in kernel 2 (one vreg sublane each)


# ---------------------------------------------------------------------------
# Kernel 1: fused regressor MLP -> lane-dense raw logits
# ---------------------------------------------------------------------------
def _scores_kernel(x_ref,            # (tm, D)   rows = flattened (batch, time)
                   w1_ref, b1_ref,   # (D, 512) compute dtype, (1, 512) f32
                   w23t_ref,         # (1, 512) compute dtype: fused (w2 @ w3)^T
                   b23_ref,          # (1, 1)   f32: fused bias
                   out_ref):         # (1, tm)  lane-dense raw logits, f32
    w1 = w1_ref[...]
    x = x_ref[...].astype(w1.dtype)                       # bf16 cast in-kernel
    h1 = jnp.dot(x, w1, preferred_element_type=jnp.float32) + b1_ref[...]
    h1 = jnp.maximum(h1, 0.0)                             # ReLU in f32
    w23t = w23t_ref[...]
    # (1, H1) x (tm, H1), contracting the feature dim -> (1, tm).  Result is
    # lane-dense so the store and the top-k kernel never touch 1-wide lanes.
    logits = lax.dot_general(
        w23t, h1.astype(w23t.dtype),
        dimension_numbers=(((1,), (1,)), ((), ())),
        preferred_element_type=jnp.float32)
    out_ref[...] = logits + b23_ref[...]


# ---------------------------------------------------------------------------
# Kernel 2: per-row top-k mean (select on raw logits, sigmoid only winners)
# ---------------------------------------------------------------------------
def _topk_mean_kernel(seq_ref,        # (ROWS, 1) int32 valid lengths (clamped)
                      s_ref,          # (ROWS, T_pad) f32 raw logits
                      out_ref,        # (ROWS, 1) f32
                      *, k_max):
    logits = s_ref[...]
    rows, t_pad = logits.shape
    seq = seq_ref[...]                                    # (rows, 1) int32
    k = seq // 16 + 1                                     # (rows, 1) int32
    k_f = k.astype(jnp.float32)

    idx = lax.broadcasted_iota(jnp.int32, (rows, t_pad), 1)
    vals = jnp.where(idx < seq, logits, NEG)              # mask beyond seq_len

    if k_max <= _SERIAL_K_LIMIT:
        # Iterative extraction, statically unrolled; all state stays vector.
        acc = jnp.zeros((rows, 1), jnp.float32)
        for j in range(k_max):
            m = jnp.max(vals, axis=-1, keepdims=True)            # (rows, 1)
            acc = acc + jnp.where(j < k, jax.nn.sigmoid(m), 0.0)
            first = jnp.min(jnp.where(vals >= m, idx, t_pad),
                            axis=-1, keepdims=True)              # first argmax
            vals = jnp.where(idx == first, NEG, vals)            # remove it
        out_ref[...] = acc / k_f
    else:
        # Exact threshold top-k: find the k-th largest value per row with a
        # 32-pass bitwise bisection on the order-preserving int32 key, then one
        # masked sigmoid reduce with tie-count correction.
        b = pltpu.bitcast(vals, jnp.int32)
        keys = b ^ ((b >> 31) & jnp.int32(0x7FFFFFFF))    # monotone f32->i32 map

        def count_ge(t_key):                              # t_key: (rows,1) i32
            return jnp.sum(jnp.where(keys >= t_key, 1.0, 0.0),
                           axis=-1, keepdims=True)        # exact (< 2^24)

        int_min = jnp.int32(-2147483648)
        nonneg = count_ge(jnp.zeros((rows, 1), jnp.int32)) >= k_f
        base = jnp.where(nonneg, jnp.int32(0), int_min)
        m = jnp.zeros((rows, 1), jnp.int32)
        for bit in range(30, -1, -1):                     # greedy max threshold
            cand = m | jnp.int32(1 << bit)
            take = count_ge(base + cand) >= k_f
            m = jnp.where(take, cand, m)
        kth_key = base + m                                # key of k-th largest
        kth_val = pltpu.bitcast(
            kth_key ^ ((kth_key >> 31) & jnp.int32(0x7FFFFFFF)), jnp.float32)

        sig = jax.nn.sigmoid(vals)                        # masked entries -> 0
        is_gt = keys > kth_key
        sum_gt = jnp.sum(jnp.where(is_gt, sig, 0.0), axis=-1, keepdims=True)
        cnt_gt = jnp.sum(jnp.where(is_gt, 1.0, 0.0), axis=-1, keepdims=True)
        sum_top = sum_gt + (k_f - cnt_gt) * jax.nn.sigmoid(kth_val)
        out_ref[...] = sum_top / k_f


# ---------------------------------------------------------------------------
# Wrapper
# ---------------------------------------------------------------------------
def _pick_row_tile(R, D):
    """Largest row tile (512/256/128) that divides R and fits a ~28 MiB VMEM
    budget (safe under the 32 MiB default scoped limit on v7x's 64 MiB part)."""
    budget = 28 * 1024 * 1024
    for tm in (512, 256, 128):
        if R % tm != 0:
            continue
        est = 2 * tm * D * 4 + D * H1 * 2 + 2 * tm * 4 + (2 << 20)
        if est <= budget:
            return tm
    return 128


def _run_scores(x_flat, w1c, b1c, w23t, b23, *, R, D, tm, single_buffer):
    wkw = dict(pipeline_mode=pl.Buffered(1)) if single_buffer else {}
    in_specs = [
        pl.BlockSpec((tm, D), lambda i: (i, 0)),           # x rows (pipelined)
        pl.BlockSpec((D, H1), lambda i: (0, 0), **wkw),    # w1 (resident)
        pl.BlockSpec((1, H1), lambda i: (0, 0), **wkw),    # b1
        pl.BlockSpec((1, H1), lambda i: (0, 0), **wkw),    # w23^T
        pl.BlockSpec((1, 1), lambda i: (0, 0), **wkw),     # b23
    ]
    cost = pl.CostEstimate(
        flops=2 * R * D * H1 + 2 * R * H1,
        transcendentals=0,
        bytes_accessed=(R * D * x_flat.dtype.itemsize
                        + D * H1 * w1c.dtype.itemsize + R * 4))
    return pl.pallas_call(
        _scores_kernel,
        out_shape=jax.ShapeDtypeStruct((1, R), jnp.float32),
        grid=(R // tm,),
        in_specs=in_specs,
        out_specs=pl.BlockSpec((1, tm), lambda i: (0, i)),
        compiler_params=pltpu.CompilerParams(
            dimension_semantics=("parallel",)),            # independent row tiles
        cost_estimate=cost,
    )(x_flat, w1c, b1c, w23t, b23)


def mil_forward(x, seq_len, params, *, compute_dtype=jnp.bfloat16):
    """x: (B, T, D) f32, seq_len: (B,) int32 -> (B,) f32 MIL scores (eval)."""
    B, T, D = x.shape
    w1, b1, w2, b2, w3, b3 = params

    # Host-side algebraic fusion of Linear(512,32) -> Linear(32,1).
    w23t = (w2 @ w3).T.astype(compute_dtype)               # (1, 512)
    b23 = (b2 @ w3 + b3).astype(jnp.float32)               # (1, 1)
    w1c = w1.astype(compute_dtype)                         # (D, 512)
    b1c = b1.astype(jnp.float32)

    # Pad T to a lane multiple only when needed; never cast x on the host
    # (the in-kernel bf16 cast avoids an extra HBM pass over x).
    T_pad = ((T + 127) // 128) * 128
    xp = x if T_pad == T else jnp.pad(x, ((0, 0), (0, T_pad - T), (0, 0)))
    x_flat = xp.reshape(B * T_pad, D)                      # contiguous, free
    R = B * T_pad
    tm = _pick_row_tile(R, D)

    try:
        scores = _run_scores(x_flat, w1c, b1c, w23t, b23,
                             R=R, D=D, tm=tm, single_buffer=True)
    except Exception:
        # TODO(synk): pl.Buffered(1) unsupported on this jax version; fall back
        # to default double-buffered weight specs (only costs extra VMEM).
        scores = _run_scores(x_flat, w1c, b1c, w23t, b23,
                             R=R, D=D, tm=tm, single_buffer=False)

    # ---- kernel 2: per-batch top-k mean, 8 batches per grid step ----------
    B_pad = ((B + _ROWS - 1) // _ROWS) * _ROWS
    scores_2d = scores.reshape(B, T_pad)                   # contiguous, free
    seq = jnp.minimum(seq_len.astype(jnp.int32), T).reshape(B, 1)
    if B_pad != B:
        scores_2d = jnp.pad(scores_2d, ((0, B_pad - B), (0, 0)))
        seq = jnp.pad(seq, ((0, B_pad - B), (0, 0)))       # pad rows -> output 0

    k_max = T // 16 + 1
    out = pl.pallas_call(
        functools.partial(_topk_mean_kernel, k_max=k_max),
        out_shape=jax.ShapeDtypeStruct((B_pad, 1), jnp.float32),
        grid=(B_pad // _ROWS,),
        in_specs=[
            pl.BlockSpec((_ROWS, 1), lambda g: (g, 0)),        # seq lengths
            pl.BlockSpec((_ROWS, T_pad), lambda g: (g, 0)),    # logit rows
        ],
        out_specs=pl.BlockSpec((_ROWS, 1), lambda g: (g, 0)),
        compiler_params=pltpu.CompilerParams(
            dimension_semantics=("parallel",)),            # batches split on v7x
    )(seq, scores_2d)
    return out[:B, 0]


# ---------------------------------------------------------------------------
# Params init + pure-JAX reference (mirrors the unfused PyTorch module)
# ---------------------------------------------------------------------------
def _init_params(key, input_dim):
    """Deterministic Linear-style init (uniform +-1/sqrt(fan_in))."""
    ks = jax.random.split(key, 6)

    def lin(kw, kb, fan_in, fan_out):
        bound = 1.0 / (fan_in ** 0.5)
        w = jax.random.uniform(kw, (fan_in, fan_out), jnp.float32, -bound, bound)
        b = jax.random.uniform(kb, (1, fan_out), jnp.float32, -bound, bound)
        return w, b

    w1, b1 = lin(ks[0], ks[1], input_dim, H1)
    w2, b2 = lin(ks[2], ks[3], H1, H2)
    w3, b3 = lin(ks[4], ks[5], H2, 1)
    return (w1, b1, w2, b2, w3, b3)


def _reference(x, seq_len, params):
    """Pure-JAX/Python reference of the PyTorch forward (eval mode, unfused)."""
    w1, b1, w2, b2, w3, b3 = params
    h1 = jnp.maximum(x @ w1 + b1, 0.0)
    h2 = h1 @ w2 + b2
    s = jax.nn.sigmoid(h2 @ w3 + b3)[..., 0]               # (B, T)
    outs = []
    for i in range(x.shape[0]):
        sl = int(seq_len[i])
        k = sl // 16 + 1
        topk = jnp.sort(s[i, :sl])[::-1][:k]
        outs.append(jnp.mean(topk))
    return jnp.stack(outs)


if __name__ == "__main__":
    key = jax.random.PRNGKey(0)

    # --- test 1: small shapes (serial top-k path); f32 exact + bf16 fast ----
    B, T, D = 2, 16, 32
    kx, kp, key = jax.random.split(key, 3)
    x = jax.random.normal(kx, (B, T, D), jnp.float32)
    seq_len = jnp.array([16, 11], dtype=jnp.int32)          # k = 2 and k = 1
    params = _init_params(kp, D)
    ref = _reference(x, seq_len, params)

    out_f32 = jax.block_until_ready(
        mil_forward(x, seq_len, params, compute_dtype=jnp.float32))
    assert out_f32.shape == (B,)
    assert jnp.allclose(out_f32, ref, atol=1e-4, rtol=1e-4), (out_f32, ref)

    out_bf16 = jax.block_until_ready(mil_forward(x, seq_len, params))
    assert jnp.allclose(out_bf16, ref, atol=1e-2, rtol=1e-2), (out_bf16, ref)

    # --- test 2: larger T exercises the threshold top-k path + 512 row tile -
    B2, T2, D2 = 4, 256, 64
    kx2, kp2, _ = jax.random.split(key, 3)
    x2 = jax.random.normal(kx2, (B2, T2, D2), jnp.float32)
    seq_len2 = jnp.array([256, 200, 100, 17], dtype=jnp.int32)
    params2 = _init_params(kp2, D2)
    ref2 = _reference(x2, seq_len2, params2)
    out2 = jax.block_until_ready(mil_forward(x2, seq_len2, params2))
    assert out2.shape == (B2,)
    assert jnp.allclose(out2, ref2, atol=1e-2, rtol=1e-2), (out2, ref2)

    print("KERNEL_OK")
</pallas_src>

<mosaic_0001>
module attributes {stable_mosaic.version = 11 : i64} {
  func.func @_scores_kernel(%arg0: i32, %arg1: memref<256x32xf32, #tpu.memory_space<vmem>>, %arg2: memref<32x512xf32, #tpu.memory_space<vmem>>, %arg3: memref<1x512xf32, #tpu.memory_space<vmem>>, %arg4: memref<1x512xf32, #tpu.memory_space<vmem>>, %arg5: memref<1x1xf32, #tpu.memory_space<vmem>>, %arg6: memref<1x256xf32, #tpu.memory_space<vmem>>) attributes {dimension_semantics = [#tpu.dimension_semantics<parallel>], iteration_bounds = array<i64: 1>, scalar_prefetch = 0 : i64, scratch_operands = 0 : i64, tpu.core_type = #tpu.core_type<tc>, window_params = [{transform_indices = @transform_0, window_bounds = array<i64: 256, 32>}, {pipeline_mode = #tpu.pipeline_mode<synchronous>, transform_indices = @transform_1, window_bounds = array<i64: 32, 512>}, {pipeline_mode = #tpu.pipeline_mode<synchronous>, transform_indices = @transform_2, window_bounds = array<i64: 1, 512>}, {pipeline_mode = #tpu.pipeline_mode<synchronous>, transform_indices = @transform_3, window_bounds = array<i64: 1, 512>}, {pipeline_mode = #tpu.pipeline_mode<synchronous>, transform_indices = @transform_4, window_bounds = array<i64: 1, 1>}, {transform_indices = @transform_5, window_bounds = array<i64: 1, 256>}]} {
    %c0 = arith.constant 0 : index
    %c0_0 = arith.constant 0 : index
    %0 = vector.load %arg2[%c0, %c0_0] : memref<32x512xf32, #tpu.memory_space<vmem>>, vector<32x512xf32>
    %c0_1 = arith.constant 0 : index
    %c0_2 = arith.constant 0 : index
    %1 = vector.load %arg1[%c0_1, %c0_2] : memref<256x32xf32, #tpu.memory_space<vmem>>, vector<256x32xf32>
    %cst = arith.constant dense<0.000000e+00> : vector<256x512xf32>
    %2 = tpu.matmul %1, %0, %cst {dimension_numbers = #tpu.dot_dimension_numbers<[1], [0], [0], [1], [0, 0, 1, 1], [], []>} : vector<256x32xf32>, vector<32x512xf32>, vector<256x512xf32> -> vector<256x512xf32>
    %c0_3 = arith.constant 0 : index
    %c0_4 = arith.constant 0 : index
    %3 = vector.load %arg3[%c0_3, %c0_4] : memref<1x512xf32, #tpu.memory_space<vmem>>, vector<1x512xf32>
    %4 = vector.broadcast %3 : vector<1x512xf32> to vector<256x512xf32>
    %5 = arith.addf %2, %4 : vector<256x512xf32>
    %cst_5 = arith.constant 0.000000e+00 : f32
    %6 = vector.broadcast %cst_5 : f32 to vector<256x512xf32>
    %7 = arith.maximumf %5, %6 : vector<256x512xf32>
    %c0_6 = arith.constant 0 : index
    %c0_7 = arith.constant 0 : index
    %8 = vector.load %arg4[%c0_6, %c0_7] : memref<1x512xf32, #tpu.memory_space<vmem>>, vector<1x512xf32>
    %cst_8 = arith.constant dense<0.000000e+00> : vector<1x256xf32>
    %9 = tpu.matmul %8, %7, %cst_8 {dimension_numbers = #tpu.dot_dimension_numbers<[1], [1], [0], [0], [0, 0, 1, 0], [], []>} : vector<1x512xf32>, vector<256x512xf32>, vector<1x256xf32> -> vector<1x256xf32>
    %c0_9 = arith.constant 0 : index
    %c0_10 = arith.constant 0 : index
    %10 = vector.load %arg5[%c0_9, %c0_10] : memref<1x1xf32, #tpu.memory_space<vmem>>, vector<1x1xf32>
    %11 = vector.broadcast %10 : vector<1x1xf32> to vector<1x256xf32>
    %12 = arith.addf %9, %11 : vector<1x256xf32>
    %c0_11 = arith.constant 0 : index
    %c0_12 = arith.constant 0 : index
    %13 = vector.load %arg6[%c0_11, %c0_12] : memref<1x256xf32, #tpu.memory_space<vmem>>, vector<1x256xf32>
    tpu.vector_store %arg6[%c0_11, %c0_12], %12 {strides = array<i32>} : memref<1x256xf32, #tpu.memory_space<vmem>>, vector<1x256xf32>,
    return
  }
  func.func @transform_0(%arg0: i32) -> (i32, i32) {
    %c0_i32 = arith.constant 0 : i32
    %c0_i32_0 = arith.constant 0 : i32
    return %arg0, %c0_i32 : i32, i32
  }
  func.func @transform_1(%arg0: i32) -> (i32, i32) {
    %c0_i32 = arith.constant 0 : i32
    %c0_i32_0 = arith.constant 0 : i32
    %c0_i32_1 = arith.constant 0 : i32
    return %c0_i32, %c0_i32_0 : i32, i32
  }
  func.func @transform_2(%arg0: i32) -> (i32, i32) {
    %c0_i32 = arith.constant 0 : i32
    %c0_i32_0 = arith.constant 0 : i32
    %c0_i32_1 = arith.constant 0 : i32
    return %c0_i32, %c0_i32_0 : i32, i32
  }
  func.func @transform_3(%arg0: i32) -> (i32, i32) {
    %c0_i32 = arith.constant 0 : i32
    %c0_i32_0 = arith.constant 0 : i32
    %c0_i32_1 = arith.constant 0 : i32
    return %c0_i32, %c0_i32_0 : i32, i32
  }
  func.func @transform_4(%arg0: i32) -> (i32, i32) {
    %c0_i32 = arith.constant 0 : i32
    %c0_i32_0 = arith.constant 0 : i32
    %c0_i32_1 = arith.constant 0 : i32
    return %c0_i32, %c0_i32_0 : i32, i32
  }
  func.func @transform_5(%arg0: i32) -> (i32, i32) {
    %c0_i32 = arith.constant 0 : i32
    %c0_i32_0 = arith.constant 0 : i32
    return %c0_i32, %arg0 : i32, i32
  }
}

module attributes {stable_mosaic.version = 11 : i64} {
  func.func @_scores_kernel(%arg0: i32, %arg1: memref<256x32xf32, #tpu.memory_space<vmem>>, %arg2: memref<32x512xf32, #tpu.memory_space<vmem>>, %arg3: memref<1x512xf32, #tpu.memory_space<vmem>>, %arg4: memref<1x512xf32, #tpu.memory_space<vmem>>, %arg5: memref<1x1xf32, #tpu.memory_space<vmem>>, %arg6: memref<1x256xf32, #tpu.memory_space<vmem>>) attributes {dimension_semantics = [#tpu.dimension_semantics<parallel>], iteration_bounds = array<i64: 1>, scalar_prefetch = 0 : i64, scratch_operands = 0 : i64, tpu.core_type = #tpu.core_type<tc>, window_params = [{transform_indices = @transform_0, window_bounds = array<i64: 256, 32>}, {pipeline_mode = #tpu.pipeline_mode<synchronous>, transform_indices = @transform_1, window_bounds = array<i64: 32, 512>}, {pipeline_mode = #tpu.pipeline_mode<synchronous>, transform_indices = @transform_2, window_bounds = array<i64: 1, 512>}, {pipeline_mode = #tpu.pipeline_mode<synchronous>, transform_indices = @transform_3, window_bounds = array<i64: 1, 512>}, {pipeline_mode = #tpu.pipeline_mode<synchronous>, transform_indices = @transform_4, window_bounds = array<i64: 1, 1>}, {transform_indices = @transform_5, window_bounds = array<i64: 1, 256>}]} {
    %c0 = arith.constant 0 : index
    %c0_0 = arith.constant 0 : index
    %0 = vector.load %arg2[%c0, %c0_0] : memref<32x512xf32, #tpu.memory_space<vmem>>, vector<32x512xf32>
    %c0_1 = arith.constant 0 : index
    %c0_2 = arith.constant 0 : index
    %1 = vector.load %arg1[%c0_1, %c0_2] : memref<256x32xf32, #tpu.memory_space<vmem>>, vector<256x32xf32>
    %cst = arith.constant dense<0.000000e+00> : vector<256x512xf32>
    %2 = tpu.matmul %1, %0, %cst {dimension_numbers = #tpu.dot_dimension_numbers<[1], [0], [0], [1], [0, 0, 1, 1], [], []>} : vector<256x32xf32>, vector<32x512xf32>, vector<256x512xf32> -> vector<256x512xf32>
    %c0_3 = arith.constant 0 : index
    %c0_4 = arith.constant 0 : index
    %3 = vector.load %arg3[%c0_3, %c0_4] : memref<1x512xf32, #tpu.memory_space<vmem>>, vector<1x512xf32>
    %4 = vector.broadcast %3 : vector<1x512xf32> to vector<256x512xf32>
    %5 = arith.addf %2, %4 : vector<256x512xf32>
    %cst_5 = arith.constant 0.000000e+00 : f32
    %6 = vector.broadcast %cst_5 : f32 to vector<256x512xf32>
    %7 = arith.maximumf %5, %6 : vector<256x512xf32>
    %c0_6 = arith.constant 0 : index
    %c0_7 = arith.constant 0 : index
    %8 = vector.load %arg4[%c0_6, %c0_7] : memref<1x512xf32, #tpu.memory_space<vmem>>, vector<1x512xf32>
    %cst_8 = arith.constant dense<0.000000e+00> : vector<1x256xf32>
    %9 = tpu.matmul %8, %7, %cst_8 {dimension_numbers = #tpu.dot_dimension_numbers<[1], [1], [0], [0], [0, 0, 1, 0], [], []>} : vector<1x512xf32>, vector<256x512xf32>, vector<1x256xf32> -> vector<1x256xf32>
    %c0_9 = arith.constant 0 : index
    %c0_10 = arith.constant 0 : index
    %10 = vector.load %arg5[%c0_9, %c0_10] : memref<1x1xf32, #tpu.memory_space<vmem>>, vector<1x1xf32>
    %11 = vector.broadcast %10 : vector<1x1xf32> to vector<1x256xf32>
    %12 = arith.addf %9, %11 : vector<1x256xf32>
    %c0_11 = arith.constant 0 : index
    %c0_12 = arith.constant 0 : index
    %13 = vector.load %arg6[%c0_11, %c0_12] : memref<1x256xf32, #tpu.memory_space<vmem>>, vector<1x256xf32>
    tpu.vector_store %arg6[%c0_11, %c0_12], %12 {strides = array<i32>} : memref<1x256xf32, #tpu.memory_space<vmem>>, vector<1x256xf32>,
    return
  }
  func.func @transform_0(%arg0: i32) -> (i32, i32) {
    %c0_i32 = arith.constant 0 : i32
    %c0_i32_0 = arith.constant 0 : i32
    return %arg0, %c0_i32 : i32, i32
  }
  func.func @transform_1(%arg0: i32) -> (i32, i32) {
    %c0_i32 = arith.constant 0 : i32
    %c0_i32_0 = arith.constant 0 : i32
    %c0_i32_1 = arith.constant 0 : i32
    return %c0_i32, %c0_i32_0 : i32, i32
  }
  func.func @transform_2(%arg0: i32) -> (i32, i32) {
    %c0_i32 = arith.constant 0 : i32
    %c0_i32_0 = arith.constant 0 : i32
    %c0_i32_1 = arith.constant 0 : i32
    return %c0_i32, %c0_i32_0 : i32, i32
  }
  func.func @transform_3(%arg0: i32) -> (i32, i32) {
    %c0_i32 = arith.constant 0 : i32
    %c0_i32_0 = arith.constant 0 : i32
    %c0_i32_1 = arith.constant 0 : i32
    return %c0_i32, %c0_i32_0 : i32, i32
  }
  func.func @transform_4(%arg0: i32) -> (i32, i32) {
    %c0_i32 = arith.constant 0 : i32
    %c0_i32_0 = arith.constant 0 : i32
    %c0_i32_1 = arith.constant 0 : i32
    return %c0_i32, %c0_i32_0 : i32, i32
  }
  func.func @transform_5(%arg0: i32) -> (i32, i32) {
    %c0_i32 = arith.constant 0 : i32
    %c0_i32_0 = arith.constant 0 : i32
    return %c0_i32, %arg0 : i32, i32
  }
}

</mosaic_0001>

<llo_original>
// kernel: tpu_custom_call.1
$region0: #{tpu_custom_call.1}
  #allocation0 [shape = 'u32[]', space=smem, size = 0x4, offset = 0x4, fixed_abs, tag = 'smem constant byte address 0x4 - core index']
  #allocation1 [shape = 'u32[144,128]{1,0:T(1,128)}', space=vmem, size = 0x12000, scoped, tag = 'internal scratch']
  #allocation2 [shape = 'f32[1,1]{1,0:T(1,128)S(1)}', space=vmem, size = 0x200, scoped, tag = 'scoped memory for tpu_custom_call.1']
  %s0 = inlined_call_operand.vmem [shape: f32[256,32], index: 0, kind: input, shape index: {}]
  %s1 = inlined_call_operand.vmem [shape: f32[32,512], index: 1, kind: input, shape index: {}]
  %s2 = inlined_call_operand.vmem [shape: f32[1,512], index: 2, kind: input, shape index: {}]
  %s3 = inlined_call_operand.vmem [shape: f32[1,512], index: 3, kind: input, shape index: {}]
  %s4 = inlined_call_operand.<no memory space> [shape: f32[1,1], index: 4, kind: input, shape index: {}]
  %s5 = inlined_call_operand.hbm [shape: f32[1,256], index: 5, kind: output, shape index: {}]
  %s6 = sld [smem:[#allocation0]]
  $region30: #{tpu_custom_call.1} parent=0
    _
  %s8 = ssub.s32 1, %s6
  %s9 = scalar_select 0, %s8, %s6
  %v10 = vstv %s4
  %11 = vst [vmem:[#allocation2] sm:$0x1] %v10
  $region1: #{tpu_custom_call.1} parent=0
    #allocation3 [shape = 'u8[1024]{0}', space=vmem, size = 0x400, scoped, tag = 'output window, operand 0, single buffered']
    #allocation4 [shape = 's32[1]{0}', space=sflag, size = 0x4, scoped, tag = 'scoped memory for tpu_custom_call.1']
    %12 = vsyncpa [#allocation4], 0
    // Predicated region
    $region2: #{tpu_custom_call.1} parent=1 // pred_check
      _
    $region3: #{tpu_custom_call.1} parent=1 // pred_check_branch
      %14 = sbr.rel (0) target = $region5
    $region4: #{tpu_custom_call.1} parent=1 // pred_region
      _
    $region5: #{tpu_custom_call.1} parent=1 // pred_fallthru
      _
    // Predicated region
    $region6: #{tpu_custom_call.1} parent=1 // pred_check
      _
    $region7: #{tpu_custom_call.1} parent=1 // pred_check_branch
      %16 = sbr.rel (0) target = $region9
    $region8: #{tpu_custom_call.1} parent=1 // pred_region
      _
    $region9: #{tpu_custom_call.1} parent=1 // pred_fallthru
      _
    // Predicated region
    $region10: #{tpu_custom_call.1} parent=1 // pred_check
      _
    $region11: #{tpu_custom_call.1} parent=1 // pred_check_branch
      %18 = sbr.rel (0) target = $region13
    $region12: #{tpu_custom_call.1} parent=1 // pred_region
      _
    $region13: #{tpu_custom_call.1} parent=1 // pred_fallthru
      _
    // Predicated region
    $region14: #{tpu_custom_call.1} parent=1 // pred_check
      _
    $region15: #{tpu_custom_call.1} parent=1 // pred_check_branch
      %20 = sbr.rel (0) target = $region17
    $region16: #{tpu_custom_call.1} parent=1 // pred_region
      _
    $region17: #{tpu_custom_call.1} parent=1 // pred_fallthru
      _
    // Predicated region
    $region18: #{tpu_custom_call.1} parent=1 // pred_check
      _
    $region19: #{tpu_custom_call.1} parent=1 // pred_check_branch
      %22 = sbr.rel (0) target = $region21
    $region20: #{tpu_custom_call.1} parent=1 // pred_region
      _
    $region21: #{tpu_custom_call.1} parent=1 // pred_fallthru
      _
    %v23 = vld [vmem:[%s1] sm:$0xff]
    %v24 = vld [vmem:[%s1 + $0x8] sm:$0xff]
    %v25 = vld [vmem:[%s1 + $0x10] sm:$0xff]
    %v26 = vld [vmem:[%s1 + $0x18] sm:$0xff]
    %v27 = vld [vmem:[%s1 + $0x20] sm:$0xff]
    %v28 = vld [vmem:[%s1 + $0x28] sm:$0xff]
    %v29 = vld [vmem:[%s1 + $0x30] sm:$0xff]
    %v30 = vld [vmem:[%s1 + $0x38] sm:$0xff]
    %v31 = vld [vmem:[%s1 + $0x40] sm:$0xff]
    %v32 = vld [vmem:[%s1 + $0x48] sm:$0xff]
    %v33 = vld [vmem:[%s1 + $0x50] sm:$0xff]
    %v34 = vld [vmem:[%s1 + $0x58] sm:$0xff]
    %v35 = vld [vmem:[%s1 + $0x60] sm:$0xff]
    %v36 = vld [vmem:[%s1 + $0x68] sm:$0xff]
    %v37 = vld [vmem:[%s1 + $0x70] sm:$0xff]
    %v38 = vld [vmem:[%s1 + $0x78] sm:$0xff]
    %v39 = vld [vmem:[%s0] sm:$0xff]
    %v40 = vld [vmem:[%s0 + $0x8] sm:$0xff]
    %v41 = vld [vmem:[%s0 + $0x10] sm:$0xff]
    %v42 = vld [vmem:[%s0 + $0x18] sm:$0xff]
    %v43 = vld [vmem:[%s0 + $0x20] sm:$0xff]
    %v44 = vld [vmem:[%s0 + $0x28] sm:$0xff]
    %v45 = vld [vmem:[%s0 + $0x30] sm:$0xff]
    %v46 = vld [vmem:[%s0 + $0x38] sm:$0xff]
    %v47 = vld [vmem:[%s0 + $0x40] sm:$0xff]
    %v48 = vld [vmem:[%s0 + $0x48] sm:$0xff]
    %v49 = vld [vmem:[%s0 + $0x50] sm:$0xff]
    %v50 = vld [vmem:[%s0 + $0x58] sm:$0xff]
    %v51 = vld [vmem:[%s0 + $0x60] sm:$0xff]
    %v52 = vld [vmem:[%s0 + $0x68] sm:$0xff]
    %v53 = vld [vmem:[%s0 + $0x70] sm:$0xff]
    %v54 = vld [vmem:[%s0 + $0x78] sm:$0xff]
    %v55 = vld [vmem:[%s0 + $0x80] sm:$0xff]
    %v56 = vld [vmem:[%s0 + $0x88] sm:$0xff]
    %v57 = vld [vmem:[%s0 + $0x90] sm:$0xff]
    %v58 = vld [vmem:[%s0 + $0x98] sm:$0xff]
    %v59 = vld [vmem:[%s0 + $0xa0] sm:$0xff]
    %v60 = vld [vmem:[%s0 + $0xa8] sm:$0xff]
    %v61 = vld [vmem:[%s0 + $0xb0] sm:$0xff]
    %v62 = vld [vmem:[%s0 + $0xb8] sm:$0xff]
    %v63 = vld [vmem:[%s0 + $0xc0] sm:$0xff]
    %v64 = vld [vmem:[%s0 + $0xc8] sm:$0xff]
    %v65 = vld [vmem:[%s0 + $0xd0] sm:$0xff]
    %v66 = vld [vmem:[%s0 + $0xd8] sm:$0xff]
    %v67 = vld [vmem:[%s0 + $0xe0] sm:$0xff]
    %v68 = vld [vmem:[%s0 + $0xe8] sm:$0xff]
    %v69 = vld [vmem:[%s0 + $0xf0] sm:$0xff]
    %v70 = vld [vmem:[%s0 + $0xf8] sm:$0xff]
    %v71 = vld [vmem:[%s2] sm:$0xf]
    %v73 = vlaneseq
    %v74 = vshrl.u32 %v73, 7
    %v75 = vsub.s32 0, %v74
    %v76 = vrot.slane %v71, %v75
    %v77 = vlaneseq
    %v78 = vshrl.u32 %v77, 7
    %v79 = vsub.s32 1, %v78
    %v80 = vrot.slane %v71, %v79
    %v81 = vlaneseq
    %v82 = vshrl.u32 %v81, 7
    %v83 = vsub.s32 2, %v82
    %v84 = vrot.slane %v71, %v83
    %v85 = vlaneseq
    %v86 = vshrl.u32 %v85, 7
    %v87 = vsub.s32 3, %v86
    %v88 = vrot.slane %v71, %v87
    %vm93 = vcmask 261120
    %v95 = vsel %vm93, %v39, 0
    %v98 = vsel %vm93, %v40, 0
    %v101 = vsel %vm93, %v41, 0
    %v104 = vsel %vm93, %v42, 0
    %v107 = vsel %vm93, %v43, 0
    %v110 = vsel %vm93, %v44, 0
    %v113 = vsel %vm93, %v45, 0
    %v116 = vsel %vm93, %v46, 0
    %v119 = vsel %vm93, %v47, 0
    %v122 = vsel %vm93, %v48, 0
    %v125 = vsel %vm93, %v49, 0
    %v128 = vsel %vm93, %v50, 0
    %v131 = vsel %vm93, %v51, 0
    %v134 = vsel %vm93, %v52, 0
    %v137 = vsel %vm93, %v53, 0
    %v140 = vsel %vm93, %v54, 0
    %v143 = vsel %vm93, %v55, 0
    %v146 = vsel %vm93, %v56, 0
    %v149 = vsel %vm93, %v57, 0
    %v152 = vsel %vm93, %v58, 0
    %v155 = vsel %vm93, %v59, 0
    %v158 = vsel %vm93, %v60, 0
    %v161 = vsel %vm93, %v61, 0
    %v164 = vsel %vm93, %v62, 0
    %v167 = vsel %vm93, %v63, 0
    %v170 = vsel %vm93, %v64, 0
    %v173 = vsel %vm93, %v65, 0
    %v176 = vsel %vm93, %v66, 0
    %v179 = vsel %vm93, %v67, 0
    %v182 = vsel %vm93, %v68, 0
    %v185 = vsel %vm93, %v69, 0
    %v188 = vsel %vm93, %v70, 0
    %190 = vmatprep.subr.mxu0 0.0
    %191 = vmatpush1.msra.mxu0 0.0
    %192 = vmatprep.subr.mxu0 0.0
    %193 = vmatpush1.msra.mxu0 0.0
    %194 = vmatprep.subr.mxu0 0.0
    %195 = vmatpush1.msra.mxu0 0.0
    %196 = vmatprep.subr.mxu0 0.0
    %197 = vmatpush1.msra.mxu0 0.0
    %198 = vmatprep.subr.mxu0 0.0
    %199 = vmatpush1.msra.mxu0 0.0
    %200 = vmatprep.subr.mxu0 0.0
    %201 = vmatpush1.msra.mxu0 0.0
    %202 = vmatprep.subr.mxu0 0.0
    %203 = vmatpush1.msra.mxu0 0.0
    %204 = vmatprep.subr.mxu0 0.0
    %205 = vmatpush1.msra.mxu0 0.0
    %206 = vmatprep.subr.mxu0 0.0
    %207 = vmatpush1.msra.mxu0 0.0
    %208 = vmatprep.subr.mxu0 0.0
    %209 = vmatpush1.msra.mxu0 0.0
    %210 = vmatprep.subr.mxu0 0.0
    %211 = vmatpush1.msra.mxu0 0.0
    %212 = vmatprep.subr.mxu0 0.0
    %213 = vmatpush1.msra.mxu0 0.0
    %214 = vmatprep.subr.mxu0 %v36
    %215 = vmatpush1.msra.mxu0 %v35
    %216 = vmatprep.subr.mxu0 %v32
    %217 = vmatpush1.msra.mxu0 %v31
    %218 = vmatprep.subr.mxu0 %v28
    %219 = vmatpush1.msra.mxu0 %v27
    %220 = vmatprep.subr.mxu0 %v24
    %221 = vmatpush1.msra.mxu0 %v23
    %222 = vmatprep.subr.mxu0 0.0
    %223 = vmatpush2.msra.mxu0 0.0
    %224 = vmatprep.subr.mxu0 0.0
    %225 = vmatpush2.msra.mxu0 0.0
    %226 = vmatprep.subr.mxu0 0.0
    %227 = vmatpush2.msra.mxu0 0.0
    %228 = vmatprep.subr.mxu0 0.0
    %229 = vmatpush2.msra.mxu0 0.0
    %230 = vmatprep.subr.mxu0 0.0
    %231 = vmatpush2.msra.mxu0 0.0
    %232 = vmatprep.subr.mxu0 0.0
    %233 = vmatpush2.msra.mxu0 0.0
    %234 = vmatprep.subr.mxu0 0.0
    %235 = vmatpush2.msra.mxu0 0.0
    %236 = vmatprep.subr.mxu0 0.0
    %237 = vmatpush2.msra.mxu0 0.0
    %238 = vmatprep.subr.mxu0 0.0
    %239 = vmatpush2.msra.mxu0 0.0
    %240 = vmatprep.subr.mxu0 0.0
    %241 = vmatpush2.msra.mxu0 0.0
    %242 = vmatprep.subr.mxu0 0.0
    %243 = vmatpush2.msra.mxu0 0.0
    %244 = vmatprep.subr.mxu0 0.0
    %245 = vmatpush2.msra.mxu0 0.0
    %246 = vmatprep.subr.mxu0 0.0
    %247 = vmatpush2.msra.mxu0 0.0
    %248 = vmatprep.subr.mxu0 0.0
    %249 = vmatpush2.msra.mxu0 0.0
    %250 = vmatprep.subr.mxu0 0.0
    %251 = vmatpush2.msra.mxu0 0.0
    %252 = vmatprep.subr.mxu0 0.0
    %253 = vmatpush2.msra.mxu0 0.0
    %254 = vmatprep.mubr.f32.mxu0 0.0
    %255 = vmatmul.mubr.f32.gmra.mxu0 %v95
    %v256 = vpop.f32.mrf.mxu0
    %v257 = vadd.f32 %v76, %v256
    %v258 = vpop.f32.mrf.mxu0
    %v259 = vadd.f32 %v80, %v258
    %260 = vmatprep.mubr.f32.mxu0 0.0
    %261 = vmatmul.mubr.f32.gmra.mxu0 %v98
    %v262 = vpop.f32.mrf.mxu0
    %v263 = vadd.f32 %v76, %v262
    %v264 = vpop.f32.mrf.mxu0
    %v265 = vadd.f32 %v80, %v264
    %266 = vmatprep.mubr.f32.mxu0 0.0
    %267 = vmatmul.mubr.f32.gmra.mxu0 %v101
    %v268 = vpop.f32.mrf.mxu0
    %v269 = vadd.f32 %v76, %v268
    %v270 = vpop.f32.mrf.mxu0
    %v271 = vadd.f32 %v80, %v270
    %272 = vmatprep.mubr.f32.mxu0 0.0
    %273 = vmatmul.mubr.f32.gmra.mxu0 %v104
    %v274 = vpop.f32.mrf.mxu0
    %v275 = vadd.f32 %v76, %v274
    %v276 = vpop.f32.mrf.mxu0
    %v277 = vadd.f32 %v80, %v276
    %278 = vmatprep.mubr.f32.mxu0 0.0
    %279 = vmatmul.mubr.f32.gmra.mxu0 %v107
    %v280 = vpop.f32.mrf.mxu0
    %v281 = vadd.f32 %v76, %v280
    %v282 = vpop.f32.mrf.mxu0
    %v283 = vadd.f32 %v80, %v282
    %284 = vmatprep.mubr.f32.mxu0 0.0
    %285 = vmatmul.mubr.f32.gmra.mxu0 %v110
    %v286 = vpop.f32.mrf.mxu0
    %v287 = vadd.f32 %v76, %v286
    %v288 = vpop.f32.mrf.mxu0
    %v289 = vadd.f32 %v80, %v288
    %290 = vmatprep.mubr.f32.mxu0 0.0
    %291 = vmatmul.mubr.f32.gmra.mxu0 %v113
    %v292 = vpop.f32.mrf.mxu0
    %v293 = vadd.f32 %v76, %v292
    %v294 = vpop.f32.mrf.mxu0
    %v295 = vadd.f32 %v80, %v294
    %296 = vmatprep.mubr.f32.mxu0 0.0
    %297 = vmatmul.mubr.f32.gmra.mxu0 %v116
    %v298 = vpop.f32.mrf.mxu0
    %v299 = vadd.f32 %v76, %v298
    %v300 = vpop.f32.mrf.mxu0
    %v301 = vadd.f32 %v80, %v300
    %302 = vmatprep.mubr.f32.mxu0 0.0
    %303 = vmatmul.mubr.f32.gmra.mxu0 %v119
    %v304 = vpop.f32.mrf.mxu0
    %v305 = vadd.f32 %v76, %v304
    %v306 = vpop.f32.mrf.mxu0
    %v307 = vadd.f32 %v80, %v306
    %308 = vmatprep.mubr.f32.mxu0 0.0
    %309 = vmatmul.mubr.f32.gmra.mxu0 %v122
    %v310 = vpop.f32.mrf.mxu0
    %v311 = vadd.f32 %v76, %v310
    %v312 = vpop.f32.mrf.mxu0
    %v313 = vadd.f32 %v80, %v312
    %314 = vmatprep.mubr.f32.mxu0 0.0
    %315 = vmatmul.mubr.f32.gmra.mxu0 %v125
    %v316 = vpop.f32.mrf.mxu0
    %v317 = vadd.f32 %v76, %v316
    %v318 = vpop.f32.mrf.mxu0
    %v319 = vadd.f32 %v80, %v318
    %320 = vmatprep.mubr.f32.mxu0 0.0
    %321 = vmatmul.mubr.f32.gmra.mxu0 %v128
    %v322 = vpop.f32.mrf.mxu0
    %v323 = vadd.f32 %v76, %v322
    %v324 = vpop.f32.mrf.mxu0
    %v325 = vadd.f32 %v80, %v324
    %326 = vmatprep.mubr.f32.mxu0 0.0
    %327 = vmatmul.mubr.f32.gmra.mxu0 %v131
    %v328 = vpop.f32.mrf.mxu0
    %v329 = vadd.f32 %v76, %v328
    %v330 = vpop.f32.mrf.mxu0
    %v331 = vadd.f32 %v80, %v330
    %332 = vmatprep.mubr.f32.mxu0 0.0
    %333 = vmatmul.mubr.f32.gmra.mxu0 %v134
    %v334 = vpop.f32.mrf.mxu0
    %v335 = vadd.f32 %v76, %v334
    %v336 = vpop.f32.mrf.mxu0
    %v337 = vadd.f32 %v80, %v336
    %338 = vmatprep.mubr.f32.mxu0 0.0
    %339 = vmatmul.mubr.f32.gmra.mxu0 %v137
    %v340 = vpop.f32.mrf.mxu0
    %v341 = vadd.f32 %v76, %v340
    %v342 = vpop.f32.mrf.mxu0
    %v343 = vadd.f32 %v80, %v342
    %344 = vmatprep.mubr.f32.mxu0 0.0
    %345 = vmatmul.mubr.f32.gmra.mxu0 %v140
    %v346 = vpop.f32.mrf.mxu0
    %v347 = vadd.f32 %v76, %v346
    %v348 = vpop.f32.mrf.mxu0
    %v349 = vadd.f32 %v80, %v348
    %350 = vmatprep.mubr.f32.mxu0 0.0
    %351 = vmatmul.mubr.f32.gmra.mxu0 %v143
    %v352 = vpop.f32.mrf.mxu0
    %v353 = vadd.f32 %v76, %v352
    %v354 = vpop.f32.mrf.mxu0
    %v355 = vadd.f32 %v80, %v354
    %356 = vmatprep.mubr.f32.mxu0 0.0
    %357 = vmatmul.mubr.f32.gmra.mxu0 %v146
    %v358 = vpop.f32.mrf.mxu0
    %v359 = vadd.f32 %v76, %v358
    %v360 = vpop.f32.mrf.mxu0
    %v361 = vadd.f32 %v80, %v360
    %362 = vmatprep.mubr.f32.mxu0 0.0
    %363 = vmatmul.mubr.f32.gmra.mxu0 %v149
    %v364 = vpop.f32.mrf.mxu0
    %v365 = vadd.f32 %v76, %v364
    %v366 = vpop.f32.mrf.mxu0
    %v367 = vadd.f32 %v80, %v366
    %368 = vmatprep.mubr.f32.mxu0 0.0
    %369 = vmatmul.mubr.f32.gmra.mxu0 %v152
    %v370 = vpop.f32.mrf.mxu0
    %v371 = vadd.f32 %v76, %v370
    %v372 = vpop.f32.mrf.mxu0
    %v373 = vadd.f32 %v80, %v372
    %374 = vmatprep.mubr.f32.mxu0 0.0
    %375 = vmatmul.mubr.f32.gmra.mxu0 %v155
    %v376 = vpop.f32.mrf.mxu0
    %v377 = vadd.f32 %v76, %v376
    %v378 = vpop.f32.mrf.mxu0
    %v379 = vadd.f32 %v80, %v378
    %380 = vmatprep.mubr.f32.mxu0 0.0
    %381 = vmatmul.mubr.f32.gmra.mxu0 %v158
    %v382 = vpop.f32.mrf.mxu0
    %v383 = vadd.f32 %v76, %v382
    %v384 = vpop.f32.mrf.mxu0
    %v385 = vadd.f32 %v80, %v384
    %386 = vmatprep.mubr.f32.mxu0 0.0
    %387 = vmatmul.mubr.f32.gmra.mxu0 %v161
    %v388 = vpop.f32.mrf.mxu0
    %v389 = vadd.f32 %v76, %v388
    %v390 = vpop.f32.mrf.mxu0
    %v391 = vadd.f32 %v80, %v390
    %392 = vmatprep.mubr.f32.mxu0 0.0
    %393 = vmatmul.mubr.f32.gmra.mxu0 %v164
    %v394 = vpop.f32.mrf.mxu0
    %v395 = vadd.f32 %v76, %v394
    %v396 = vpop.f32.mrf.mxu0
    %v397 = vadd.f32 %v80, %v396
    %398 = vmatprep.mubr.f32.mxu0 0.0
    %399 = vmatmul.mubr.f32.gmra.mxu0 %v167
    %v400 = vpop.f32.mrf.mxu0
    %v401 = vadd.f32 %v76, %v400
    %v402 = vpop.f32.mrf.mxu0
    %v403 = vadd.f32 %v80, %v402
    %404 = vmatprep.mubr.f32.mxu0 0.0
    %405 = vmatmul.mubr.f32.gmra.mxu0 %v170
    %v406 = vpop.f32.mrf.mxu0
    %v407 = vadd.f32 %v76, %v406
    %v408 = vpop.f32.mrf.mxu0
    %v409 = vadd.f32 %v80, %v408
    %410 = vmatprep.mubr.f32.mxu0 0.0
    %411 = vmatmul.mubr.f32.gmra.mxu0 %v173
    %v412 = vpop.f32.mrf.mxu0
    %v413 = vadd.f32 %v76, %v412
    %v414 = vpop.f32.mrf.mxu0
    %v415 = vadd.f32 %v80, %v414
    %416 = vmatprep.mubr.f32.mxu0 0.0
    %417 = vmatmul.mubr.f32.gmra.mxu0 %v176
    %v418 = vpop.f32.mrf.mxu0
    %v419 = vadd.f32 %v76, %v418
    %v420 = vpop.f32.mrf.mxu0
    %v421 = vadd.f32 %v80, %v420
    %422 = vmatprep.mubr.f32.mxu0 0.0
    %423 = vmatmul.mubr.f32.gmra.mxu0 %v179
    %v424 = vpop.f32.mrf.mxu0
    %v425 = vadd.f32 %v76, %v424
    %v426 = vpop.f32.mrf.mxu0
    %v427 = vadd.f32 %v80, %v426
    %428 = vmatprep.mubr.f32.mxu0 0.0
    %429 = vmatmul.mubr.f32.gmra.mxu0 %v182
    %v430 = vpop.f32.mrf.mxu0
    %v431 = vadd.f32 %v76, %v430
    %v432 = vpop.f32.mrf.mxu0
    %v433 = vadd.f32 %v80, %v432
    %434 = vmatprep.mubr.f32.mxu0 0.0
    %435 = vmatmul.mubr.f32.gmra.mxu0 %v185
    %v436 = vpop.f32.mrf.mxu0
    %v437 = vadd.f32 %v76, %v436
    %v438 = vpop.f32.mrf.mxu0
    %v439 = vadd.f32 %v80, %v438
    %440 = vmatprep.mubr.f32.mxu0 0.0
    %441 = vmatmul.mubr.f32.gmra.mxu0 %v188
    %v442 = vpop.f32.mrf.mxu0
    %v443 = vadd.f32 %v76, %v442
    %v444 = vpop.f32.mrf.mxu0
    %v445 = vadd.f32 %v80, %v444
    %446 = vdwg.mxu0
    %447 = vmatprep.subr.mxu0 0.0
    %448 = vmatpush1.msra.mxu0 0.0
    %449 = vmatprep.subr.mxu0 0.0
    %450 = vmatpush1.msra.mxu0 0.0
    %451 = vmatprep.subr.mxu0 0.0
    %452 = vmatpush1.msra.mxu0 0.0
    %453 = vmatprep.subr.mxu0 0.0
    %454 = vmatpush1.msra.mxu0 0.0
    %455 = vmatprep.subr.mxu0 0.0
    %456 = vmatpush1.msra.mxu0 0.0
    %457 = vmatprep.subr.mxu0 0.0
    %458 = vmatpush1.msra.mxu0 0.0
    %459 = vmatprep.subr.mxu0 0.0
    %460 = vmatpush1.msra.mxu0 0.0
    %461 = vmatprep.subr.mxu0 0.0
    %462 = vmatpush1.msra.mxu0 0.0
    %463 = vmatprep.subr.mxu0 0.0
    %464 = vmatpush1.msra.mxu0 0.0
    %465 = vmatprep.subr.mxu0 0.0
    %466 = vmatpush1.msra.mxu0 0.0
    %467 = vmatprep.subr.mxu0 0.0
    %468 = vmatpush1.msra.mxu0 0.0
    %469 = vmatprep.subr.mxu0 0.0
    %470 = vmatpush1.msra.mxu0 0.0
    %471 = vmatprep.subr.mxu0 %v38
    %472 = vmatpush1.msra.mxu0 %v37
    %473 = vmatprep.subr.mxu0 %v34
    %474 = vmatpush1.msra.mxu0 %v33
    %475 = vmatprep.subr.mxu0 %v30
    %476 = vmatpush1.msra.mxu0 %v29
    %477 = vmatprep.subr.mxu0 %v26
    %478 = vmatpush1.msra.mxu0 %v25
    %479 = vmatprep.subr.mxu0 0.0
    %480 = vmatpush2.msra.mxu0 0.0
    %481 = vmatprep.subr.mxu0 0.0
    %482 = vmatpush2.msra.mxu0 0.0
    %483 = vmatprep.subr.mxu0 0.0
    %484 = vmatpush2.msra.mxu0 0.0
    %485 = vmatprep.subr.mxu0 0.0
    %486 = vmatpush2.msra.mxu0 0.0
    %487 = vmatprep.subr.mxu0 0.0
    %488 = vmatpush2.msra.mxu0 0.0
    %489 = vmatprep.subr.mxu0 0.0
    %490 = vmatpush2.msra.mxu0 0.0
    %491 = vmatprep.subr.mxu0 0.0
    %492 = vmatpush2.msra.mxu0 0.0
    %493 = vmatprep.subr.mxu0 0.0
    %494 = vmatpush2.msra.mxu0 0.0
    %495 = vmatprep.subr.mxu0 0.0
    %496 = vmatpush2.msra.mxu0 0.0
    %497 = vmatprep.subr.mxu0 0.0
    %498 = vmatpush2.msra.mxu0 0.0
    %499 = vmatprep.subr.mxu0 0.0
    %500 = vmatpush2.msra.mxu0 0.0
    %501 = vmatprep.subr.mxu0 0.0
    %502 = vmatpush2.msra.mxu0 0.0
    %503 = vmatprep.subr.mxu0 0.0
    %504 = vmatpush2.msra.mxu0 0.0
    %505 = vmatprep.subr.mxu0 0.0
    %506 = vmatpush2.msra.mxu0 0.0
    %507 = vmatprep.subr.mxu0 0.0
    %508 = vmatpush2.msra.mxu0 0.0
    %509 = vmatprep.subr.mxu0 0.0
    %510 = vmatpush2.msra.mxu0 0.0
    %511 = vmatprep.mubr.f32.mxu0 0.0
    %512 = vmatmul.mubr.f32.gmra.mxu0 %v95
    %v513 = vpop.f32.mrf.mxu0
    %v514 = vadd.f32 %v84, %v513
    %v515 = vpop.f32.mrf.mxu0
    %v516 = vadd.f32 %v88, %v515
    %517 = vmatprep.mubr.f32.mxu0 0.0
    %518 = vmatmul.mubr.f32.gmra.mxu0 %v98
    %v519 = vpop.f32.mrf.mxu0
    %v520 = vadd.f32 %v84, %v519
    %v521 = vpop.f32.mrf.mxu0
    %v522 = vadd.f32 %v88, %v521
    %523 = vmatprep.mubr.f32.mxu0 0.0
    %524 = vmatmul.mubr.f32.gmra.mxu0 %v101
    %v525 = vpop.f32.mrf.mxu0
    %v526 = vadd.f32 %v84, %v525
    %v527 = vpop.f32.mrf.mxu0
    %v528 = vadd.f32 %v88, %v527
    %529 = vmatprep.mubr.f32.mxu0 0.0
    %530 = vmatmul.mubr.f32.gmra.mxu0 %v104
    %v531 = vpop.f32.mrf.mxu0
    %v532 = vadd.f32 %v84, %v531
    %v533 = vpop.f32.mrf.mxu0
    %v534 = vadd.f32 %v88, %v533
    %535 = vmatprep.mubr.f32.mxu0 0.0
    %536 = vmatmul.mubr.f32.gmra.mxu0 %v107
    %v537 = vpop.f32.mrf.mxu0
    %v538 = vadd.f32 %v84, %v537
    %v539 = vpop.f32.mrf.mxu0
    %v540 = vadd.f32 %v88, %v539
    %541 = vmatprep.mubr.f32.mxu0 0.0
    %542 = vmatmul.mubr.f32.gmra.mxu0 %v110
    %v543 = vpop.f32.mrf.mxu0
    %v544 = vadd.f32 %v84, %v543
    %v545 = vpop.f32.mrf.mxu0
    %v546 = vadd.f32 %v88, %v545
    %547 = vmatprep.mubr.f32.mxu0 0.0
    %548 = vmatmul.mubr.f32.gmra.mxu0 %v113
    %v549 = vpop.f32.mrf.mxu0
    %v550 = vadd.f32 %v84, %v549
    %v551 = vpop.f32.mrf.mxu0
    %v552 = vadd.f32 %v88, %v551
    %553 = vmatprep.mubr.f32.mxu0 0.0
    %554 = vmatmul.mubr.f32.gmra.mxu0 %v116
    %v555 = vpop.f32.mrf.mxu0
    %v556 = vadd.f32 %v84, %v555
    %v557 = vpop.f32.mrf.mxu0
    %v558 = vadd.f32 %v88, %v557
    %559 = vmatprep.mubr.f32.mxu0 0.0
    %560 = vmatmul.mubr.f32.gmra.mxu0 %v119
    %v561 = vpop.f32.mrf.mxu0
    %v562 = vadd.f32 %v84, %v561
    %v563 = vpop.f32.mrf.mxu0
    %v564 = vadd.f32 %v88, %v563
    %565 = vmatprep.mubr.f32.mxu0 0.0
    %566 = vmatmul.mubr.f32.gmra.mxu0 %v122
    %v567 = vpop.f32.mrf.mxu0
    %v568 = vadd.f32 %v84, %v567
    %v569 = vpop.f32.mrf.mxu0
    %v570 = vadd.f32 %v88, %v569
    %571 = vmatprep.mubr.f32.mxu0 0.0
    %572 = vmatmul.mubr.f32.gmra.mxu0 %v125
    %v573 = vpop.f32.mrf.mxu0
    %v574 = vadd.f32 %v84, %v573
    %v575 = vpop.f32.mrf.mxu0
    %v576 = vadd.f32 %v88, %v575
    %577 = vmatprep.mubr.f32.mxu0 0.0
    %578 = vmatmul.mubr.f32.gmra.mxu0 %v128
    %v579 = vpop.f32.mrf.mxu0
    %v580 = vadd.f32 %v84, %v579
    %v581 = vpop.f32.mrf.mxu0
    %v582 = vadd.f32 %v88, %v581
    %583 = vmatprep.mubr.f32.mxu0 0.0
    %584 = vmatmul.mubr.f32.gmra.mxu0 %v131
    %v585 = vpop.f32.mrf.mxu0
    %v586 = vadd.f32 %v84, %v585
    %v587 = vpop.f32.mrf.mxu0
    %v588 = vadd.f32 %v88, %v587
    %589 = vmatprep.mubr.f32.mxu0 0.0
    %590 = vmatmul.mubr.f32.gmra.mxu0 %v134
    %v591 = vpop.f32.mrf.mxu0
    %v592 = vadd.f32 %v84, %v591
    %v593 = vpop.f32.mrf.mxu0
    %v594 = vadd.f32 %v88, %v593
    %595 = vmatprep.mubr.f32.mxu0 0.0
    %596 = vmatmul.mubr.f32.gmra.mxu0 %v137
    %v597 = vpop.f32.mrf.mxu0
    %v598 = vadd.f32 %v84, %v597
    %v599 = vpop.f32.mrf.mxu0
    %v600 = vadd.f32 %v88, %v599
    %601 = vmatprep.mubr.f32.mxu0 0.0
    %602 = vmatmul.mubr.f32.gmra.mxu0 %v140
    %v603 = vpop.f32.mrf.mxu0
    %v604 = vadd.f32 %v84, %v603
    %v605 = vpop.f32.mrf.mxu0
    %v606 = vadd.f32 %v88, %v605
    %607 = vmatprep.mubr.f32.mxu0 0.0
    %608 = vmatmul.mubr.f32.gmra.mxu0 %v143
    %v609 = vpop.f32.mrf.mxu0
    %v610 = vadd.f32 %v84, %v609
    %v611 = vpop.f32.mrf.mxu0
    %v612 = vadd.f32 %v88, %v611
    %613 = vmatprep.mubr.f32.mxu0 0.0
    %614 = vmatmul.mubr.f32.gmra.mxu0 %v146
    %v615 = vpop.f32.mrf.mxu0
    %v616 = vadd.f32 %v84, %v615
    %v617 = vpop.f32.mrf.mxu0
    %v618 = vadd.f32 %v88, %v617
    %619 = vmatprep.mubr.f32.mxu0 0.0
    %620 = vmatmul.mubr.f32.gmra.mxu0 %v149
    %v621 = vpop.f32.mrf.mxu0
    %v622 = vadd.f32 %v84, %v621
    %v623 = vpop.f32.mrf.mxu0
    %v624 = vadd.f32 %v88, %v623
    %625 = vmatprep.mubr.f32.mxu0 0.0
    %626 = vmatmul.mubr.f32.gmra.mxu0 %v152
    %v627 = vpop.f32.mrf.mxu0
    %v628 = vadd.f32 %v84, %v627
    %v629 = vpop.f32.mrf.mxu0
    %v630 = vadd.f32 %v88, %v629
    %631 = vmatprep.mubr.f32.mxu0 0.0
    %632 = vmatmul.mubr.f32.gmra.mxu0 %v155
    %v633 = vpop.f32.mrf.mxu0
    %v634 = vadd.f32 %v84, %v633
    %v635 = vpop.f32.mrf.mxu0
    %v636 = vadd.f32 %v88, %v635
    %637 = vmatprep.mubr.f32.mxu0 0.0
    %638 = vmatmul.mubr.f32.gmra.mxu0 %v158
    %v639 = vpop.f32.mrf.mxu0
    %v640 = vadd.f32 %v84, %v639
    %v641 = vpop.f32.mrf.mxu0
    %v642 = vadd.f32 %v88, %v641
    %643 = vmatprep.mubr.f32.mxu0 0.0
    %644 = vmatmul.mubr.f32.gmra.mxu0 %v161
    %v645 = vpop.f32.mrf.mxu0
    %v646 = vadd.f32 %v84, %v645
    %v647 = vpop.f32.mrf.mxu0
    %v648 = vadd.f32 %v88, %v647
    %649 = vmatprep.mubr.f32.mxu0 0.0
    %650 = vmatmul.mubr.f32.gmra.mxu0 %v164
    %v651 = vpop.f32.mrf.mxu0
    %v652 = vadd.f32 %v84, %v651
    %v653 = vpop.f32.mrf.mxu0
    %v654 = vadd.f32 %v88, %v653
    %655 = vmatprep.mubr.f32.mxu0 0.0
    %656 = vmatmul.mubr.f32.gmra.mxu0 %v167
    %v657 = vpop.f32.mrf.mxu0
    %v658 = vadd.f32 %v84, %v657
    %v659 = vpop.f32.mrf.mxu0
    %v660 = vadd.f32 %v88, %v659
    %661 = vmatprep.mubr.f32.mxu0 0.0
    %662 = vmatmul.mubr.f32.gmra.mxu0 %v170
    %v663 = vpop.f32.mrf.mxu0
    %v664 = vadd.f32 %v84, %v663
    %v665 = vpop.f32.mrf.mxu0
    %v666 = vadd.f32 %v88, %v665
    %667 = vmatprep.mubr.f32.mxu0 0.0
    %668 = vmatmul.mubr.f32.gmra.mxu0 %v173
    %v669 = vpop.f32.mrf.mxu0
    %v670 = vadd.f32 %v84, %v669
    %v671 = vpop.f32.mrf.mxu0
    %v672 = vadd.f32 %v88, %v671
    %673 = vmatprep.mubr.f32.mxu0 0.0
    %674 = vmatmul.mubr.f32.gmra.mxu0 %v176
    %v675 = vpop.f32.mrf.mxu0
    %v676 = vadd.f32 %v84, %v675
    %v677 = vpop.f32.mrf.mxu0
    %v678 = vadd.f32 %v88, %v677
    %679 = vmatprep.mubr.f32.mxu0 0.0
    %680 = vmatmul.mubr.f32.gmra.mxu0 %v179
    %v681 = vpop.f32.mrf.mxu0
    %v682 = vadd.f32 %v84, %v681
    %v683 = vpop.f32.mrf.mxu0
    %v684 = vadd.f32 %v88, %v683
    %685 = vmatprep.mubr.f32.mxu0 0.0
    %686 = vmatmul.mubr.f32.gmra.mxu0 %v182
    %v687 = vpop.f32.mrf.mxu0
    %v688 = vadd.f32 %v84, %v687
    %v689 = vpop.f32.mrf.mxu0
    %v690 = vadd.f32 %v88, %v689
    %691 = vmatprep.mubr.f32.mxu0 0.0
    %692 = vmatmul.mubr.f32.gmra.mxu0 %v185
    %v693 = vpop.f32.mrf.mxu0
    %v694 = vadd.f32 %v84, %v693
    %v695 = vpop.f32.mrf.mxu0
    %v696 = vadd.f32 %v88, %v695
    %697 = vmatprep.mubr.f32.mxu0 0.0
    %698 = vmatmul.mubr.f32.gmra.mxu0 %v188
    %v699 = vpop.f32.mrf.mxu0
    %v700 = vadd.f32 %v84, %v699
    %v701 = vpop.f32.mrf.mxu0
    %v702 = vadd.f32 %v88, %v701
    %703 = vdwg.mxu0
    %v704 = vmax.f32 %v257, 0.0
    %v705 = vmax.f32 %v259, 0.0
    %v706 = vmax.f32 %v514, 0.0
    %v707 = vmax.f32 %v516, 0.0
    %v708 = vmax.f32 %v263, 0.0
    %v709 = vmax.f32 %v265, 0.0
    %v710 = vmax.f32 %v520, 0.0
    %v711 = vmax.f32 %v522, 0.0
    %v712 = vmax.f32 %v269, 0.0
    %v713 = vmax.f32 %v271, 0.0
    %v714 = vmax.f32 %v526, 0.0
    %v715 = vmax.f32 %v528, 0.0
    %v716 = vmax.f32 %v275, 0.0
    %v717 = vmax.f32 %v277, 0.0
    %v718 = vmax.f32 %v532, 0.0
    %v719 = vmax.f32 %v534, 0.0
    %v720 = vmax.f32 %v281, 0.0
    %v721 = vmax.f32 %v283, 0.0
    %v722 = vmax.f32 %v538, 0.0
    %v723 = vmax.f32 %v540, 0.0
    %v724 = vmax.f32 %v287, 0.0
    %v725 = vmax.f32 %v289, 0.0
    %v726 = vmax.f32 %v544, 0.0
    %v727 = vmax.f32 %v546, 0.0
    %v728 = vmax.f32 %v293, 0.0
    %v729 = vmax.f32 %v295, 0.0
    %v730 = vmax.f32 %v550, 0.0
    %v731 = vmax.f32 %v552, 0.0
    %v732 = vmax.f32 %v299, 0.0
    %v733 = vmax.f32 %v301, 0.0
    %v734 = vmax.f32 %v556, 0.0
    %v735 = vmax.f32 %v558, 0.0
    %v736 = vmax.f32 %v305, 0.0
    %v737 = vmax.f32 %v307, 0.0
    %v738 = vmax.f32 %v562, 0.0
    %v739 = vmax.f32 %v564, 0.0
    %v740 = vmax.f32 %v311, 0.0
    %v741 = vmax.f32 %v313, 0.0
    %v742 = vmax.f32 %v568, 0.0
    %v743 = vmax.f32 %v570, 0.0
    %v744 = vmax.f32 %v317, 0.0
    %v745 = vmax.f32 %v319, 0.0
    %v746 = vmax.f32 %v574, 0.0
    %v747 = vmax.f32 %v576, 0.0
    %v748 = vmax.f32 %v323, 0.0
    %v749 = vmax.f32 %v325, 0.0
    %v750 = vmax.f32 %v580, 0.0
    %v751 = vmax.f32 %v582, 0.0
    %v752 = vmax.f32 %v329, 0.0
    %v753 = vmax.f32 %v331, 0.0
    %v754 = vmax.f32 %v586, 0.0
    %v755 = vmax.f32 %v588, 0.0
    %v756 = vmax.f32 %v335, 0.0
    %v757 = vmax.f32 %v337, 0.0
    %v758 = vmax.f32 %v592, 0.0
    %v759 = vmax.f32 %v594, 0.0
    %v760 = vmax.f32 %v341, 0.0
    %v761 = vmax.f32 %v343, 0.0
    %v762 = vmax.f32 %v598, 0.0
    %v763 = vmax.f32 %v600, 0.0
    %v764 = vmax.f32 %v347, 0.0
    %v765 = vmax.f32 %v349, 0.0
    %v766 = vmax.f32 %v604, 0.0
    %v767 = vmax.f32 %v606, 0.0
    %v768 = vmax.f32 %v353, 0.0
    %v769 = vmax.f32 %v355, 0.0
    %v770 = vmax.f32 %v610, 0.0
    %v771 = vmax.f32 %v612, 0.0
    %v772 = vmax.f32 %v359, 0.0
    %v773 = vmax.f32 %v361, 0.0
    %v774 = vmax.f32 %v616, 0.0
    %v775 = vmax.f32 %v618, 0.0
    %v776 = vmax.f32 %v365, 0.0
    %v777 = vmax.f32 %v367, 0.0
    %v778 = vmax.f32 %v622, 0.0
    %v779 = vmax.f32 %v624, 0.0
    %v780 = vmax.f32 %v371, 0.0
    %v781 = vmax.f32 %v373, 0.0
    %v782 = vmax.f32 %v628, 0.0
    %v783 = vmax.f32 %v630, 0.0
    %v784 = vmax.f32 %v377, 0.0
    %v785 = vmax.f32 %v379, 0.0
    %v786 = vmax.f32 %v634, 0.0
    %v787 = vmax.f32 %v636, 0.0
    %v788 = vmax.f32 %v383, 0.0
    %v789 = vmax.f32 %v385, 0.0
    %v790 = vmax.f32 %v640, 0.0
    %v791 = vmax.f32 %v642, 0.0
    %v792 = vmax.f32 %v389, 0.0
    %v793 = vmax.f32 %v391, 0.0
    %v794 = vmax.f32 %v646, 0.0
    %v795 = vmax.f32 %v648, 0.0
    %v796 = vmax.f32 %v395, 0.0
    %v797 = vmax.f32 %v397, 0.0
    %v798 = vmax.f32 %v652, 0.0
    %v799 = vmax.f32 %v654, 0.0
    %v800 = vmax.f32 %v401, 0.0
    %v801 = vmax.f32 %v403, 0.0
    %v802 = vmax.f32 %v658, 0.0
    %v803 = vmax.f32 %v660, 0.0
    %v804 = vmax.f32 %v407, 0.0
    %v805 = vmax.f32 %v409, 0.0
    %v806 = vmax.f32 %v664, 0.0
    %v807 = vmax.f32 %v666, 0.0
    %v808 = vmax.f32 %v413, 0.0
    %v809 = vmax.f32 %v415, 0.0
    %v810 = vmax.f32 %v670, 0.0
    %v811 = vmax.f32 %v672, 0.0
    %v812 = vmax.f32 %v419, 0.0
    %v813 = vmax.f32 %v421, 0.0
    %v814 = vmax.f32 %v676, 0.0
    %v815 = vmax.f32 %v678, 0.0
    %v816 = vmax.f32 %v425, 0.0
    %v817 = vmax.f32 %v427, 0.0
    %v818 = vmax.f32 %v682, 0.0
    %v819 = vmax.f32 %v684, 0.0
    %v820 = vmax.f32 %v431, 0.0
    %v821 = vmax.f32 %v433, 0.0
    %v822 = vmax.f32 %v688, 0.0
    %v823 = vmax.f32 %v690, 0.0
    %v824 = vmax.f32 %v437, 0.0
    %v825 = vmax.f32 %v439, 0.0
    %v826 = vmax.f32 %v694, 0.0
    %v827 = vmax.f32 %v696, 0.0
    %v828 = vmax.f32 %v443, 0.0
    %v829 = vmax.f32 %v445, 0.0
    %v830 = vmax.f32 %v700, 0.0
    %v831 = vmax.f32 %v702, 0.0
    %v832 = vld [vmem:[%s3] sm:$0xf]
    %v833 = vld [vmem:[#allocation2] sm:$0x1]
    %835 = vset.pattern.permute.xlu0 0
    %836 = vperm.xlu0 %835, %v833
    %v837 = vpop.permute.xlu0 %836
    %v839 = vlaneseq
    %v840 = vshrl.u32 %v839, 7
    %v841 = vsub.s32 0, %v840
    %v842 = vrot.slane %v837, %v841
    %v844 = vlaneseq
    %v845 = vshrl.u32 %v844, 7
    %v846 = vsub.s32 0, %v845
    %v847 = vrot.slane %v832, %v846
    %v848 = vlaneseq
    %v849 = vshrl.u32 %v848, 7
    %v850 = vsub.s32 1, %v849
    %v851 = vrot.slane %v832, %v850
    %v852 = vlaneseq
    %v853 = vshrl.u32 %v852, 7
    %v854 = vsub.s32 2, %v853
    %v855 = vrot.slane %v832, %v854
    %v856 = vlaneseq
    %v857 = vshrl.u32 %v856, 7
    %v858 = vsub.s32 3, %v857
    %v859 = vrot.slane %v832, %v858
    %864 = vmatprep.subr.mxu0 %v765
    %865 = vmatpush1.xpose.msra.mxu0 %v764
    %866 = vmatprep.subr.mxu0 %v761
    %867 = vmatpush1.xpose.msra.mxu0 %v760
    %868 = vmatprep.subr.mxu0 %v757
    %869 = vmatpush1.xpose.msra.mxu0 %v756
    %870 = vmatprep.subr.mxu0 %v753
    %871 = vmatpush1.xpose.msra.mxu0 %v752
    %872 = vmatprep.subr.mxu0 %v749
    %873 = vmatpush1.xpose.msra.mxu0 %v748
    %874 = vmatprep.subr.mxu0 %v745
    %875 = vmatpush1.xpose.msra.mxu0 %v744
    %876 = vmatprep.subr.mxu0 %v741
    %877 = vmatpush1.xpose.msra.mxu0 %v740
    %878 = vmatprep.subr.mxu0 %v737
    %879 = vmatpush1.xpose.msra.mxu0 %v736
    %880 = vmatprep.subr.mxu0 %v733
    %881 = vmatpush1.xpose.msra.mxu0 %v732
    %882 = vmatprep.subr.mxu0 %v729
    %883 = vmatpush1.xpose.msra.mxu0 %v728
    %884 = vmatprep.subr.mxu0 %v725
    %885 = vmatpush1.xpose.msra.mxu0 %v724
    %886 = vmatprep.subr.mxu0 %v721
    %887 = vmatpush1.xpose.msra.mxu0 %v720
    %888 = vmatprep.subr.mxu0 %v717
    %889 = vmatpush1.xpose.msra.mxu0 %v716
    %890 = vmatprep.subr.mxu0 %v713
    %891 = vmatpush1.xpose.msra.mxu0 %v712
    %892 = vmatprep.subr.mxu0 %v709
    %893 = vmatpush1.xpose.msra.mxu0 %v708
    %894 = vmatprep.subr.mxu0 %v705
    %895 = vmatpush1.xpose.msra.mxu0 %v704
    %896 = vmatprep.subr.mxu0 %v829
    %897 = vmatpush2.xpose.msra.mxu0 %v828
    %898 = vmatprep.subr.mxu0 %v825
    %899 = vmatpush2.xpose.msra.mxu0 %v824
    %900 = vmatprep.subr.mxu0 %v821
    %901 = vmatpush2.xpose.msra.mxu0 %v820
    %902 = vmatprep.subr.mxu0 %v817
    %903 = vmatpush2.xpose.msra.mxu0 %v816
    %904 = vmatprep.subr.mxu0 %v813
    %905 = vmatpush2.xpose.msra.mxu0 %v812
    %906 = vmatprep.subr.mxu0 %v809
    %907 = vmatpush2.xpose.msra.mxu0 %v808
    %908 = vmatprep.subr.mxu0 %v805
    %909 = vmatpush2.xpose.msra.mxu0 %v804
    %910 = vmatprep.subr.mxu0 %v801
    %911 = vmatpush2.xpose.msra.mxu0 %v800
    %912 = vmatprep.subr.mxu0 %v797
    %913 = vmatpush2.xpose.msra.mxu0 %v796
    %914 = vmatprep.subr.mxu0 %v793
    %915 = vmatpush2.xpose.msra.mxu0 %v792
    %916 = vmatprep.subr.mxu0 %v789
    %917 = vmatpush2.xpose.msra.mxu0 %v788
    %918 = vmatprep.subr.mxu0 %v785
    %919 = vmatpush2.xpose.msra.mxu0 %v784
    %920 = vmatprep.subr.mxu0 %v781
    %921 = vmatpush2.xpose.msra.mxu0 %v780
    %922 = vmatprep.subr.mxu0 %v777
    %923 = vmatpush2.xpose.msra.mxu0 %v776
    %924 = vmatprep.subr.mxu0 %v773
    %925 = vmatpush2.xpose.msra.mxu0 %v772
    %926 = vmatprep.subr.mxu0 %v769
    %927 = vmatpush2.xpose.msra.mxu0 %v768
    %928 = vmatprep.mubr.f32.mxu0 %v851
    %929 = vmatmul.mubr.f32.gmra.mxu0 %v847
    %v930 = vpop.f32.mrf.mxu0
    %v931 = vadd.f32 %v842, %v930
    %v932 = vpop.f32.mrf.mxu0
    %v933 = vadd.f32 %v842, %v932
    %934 = vdwg.mxu0
    %935 = vmatprep.subr.mxu0 %v767
    %936 = vmatpush1.xpose.msra.mxu0 %v766
    %937 = vmatprep.subr.mxu0 %v763
    %938 = vmatpush1.xpose.msra.mxu0 %v762
    %939 = vmatprep.subr.mxu0 %v759
    %940 = vmatpush1.xpose.msra.mxu0 %v758
    %941 = vmatprep.subr.mxu0 %v755
    %942 = vmatpush1.xpose.msra.mxu0 %v754
    %943 = vmatprep.subr.mxu0 %v751
    %944 = vmatpush1.xpose.msra.mxu0 %v750
    %945 = vmatprep.subr.mxu0 %v747
    %946 = vmatpush1.xpose.msra.mxu0 %v746
    %947 = vmatprep.subr.mxu0 %v743
    %948 = vmatpush1.xpose.msra.mxu0 %v742
    %949 = vmatprep.subr.mxu0 %v739
    %950 = vmatpush1.xpose.msra.mxu0 %v738
    %951 = vmatprep.subr.mxu0 %v735
    %952 = vmatpush1.xpose.msra.mxu0 %v734
    %953 = vmatprep.subr.mxu0 %v731
    %954 = vmatpush1.xpose.msra.mxu0 %v730
    %955 = vmatprep.subr.mxu0 %v727
    %956 = vmatpush1.xpose.msra.mxu0 %v726
    %957 = vmatprep.subr.mxu0 %v723
    %958 = vmatpush1.xpose.msra.mxu0 %v722
    %959 = vmatprep.subr.mxu0 %v719
    %960 = vmatpush1.xpose.msra.mxu0 %v718
    %961 = vmatprep.subr.mxu0 %v715
    %962 = vmatpush1.xpose.msra.mxu0 %v714
    %963 = vmatprep.subr.mxu0 %v711
    %964 = vmatpush1.xpose.msra.mxu0 %v710
    %965 = vmatprep.subr.mxu0 %v707
    %966 = vmatpush1.xpose.msra.mxu0 %v706
    %967 = vmatprep.subr.mxu0 %v831
    %968 = vmatpush2.xpose.msra.mxu0 %v830
    %969 = vmatprep.subr.mxu0 %v827
    %970 = vmatpush2.xpose.msra.mxu0 %v826
    %971 = vmatprep.subr.mxu0 %v823
    %972 = vmatpush2.xpose.msra.mxu0 %v822
    %973 = vmatprep.subr.mxu0 %v819
    %974 = vmatpush2.xpose.msra.mxu0 %v818
    %975 = vmatprep.subr.mxu0 %v815
    %976 = vmatpush2.xpose.msra.mxu0 %v814
    %977 = vmatprep.subr.mxu0 %v811
    %978 = vmatpush2.xpose.msra.mxu0 %v810
    %979 = vmatprep.subr.mxu0 %v807
    %980 = vmatpush2.xpose.msra.mxu0 %v806
    %981 = vmatprep.subr.mxu0 %v803
    %982 = vmatpush2.xpose.msra.mxu0 %v802
    %983 = vmatprep.subr.mxu0 %v799
    %984 = vmatpush2.xpose.msra.mxu0 %v798
    %985 = vmatprep.subr.mxu0 %v795
    %986 = vmatpush2.xpose.msra.mxu0 %v794
    %987 = vmatprep.subr.mxu0 %v791
    %988 = vmatpush2.xpose.msra.mxu0 %v790
    %989 = vmatprep.subr.mxu0 %v787
    %990 = vmatpush2.xpose.msra.mxu0 %v786
    %991 = vmatprep.subr.mxu0 %v783
    %992 = vmatpush2.xpose.msra.mxu0 %v782
    %993 = vmatprep.subr.mxu0 %v779
    %994 = vmatpush2.xpose.msra.mxu0 %v778
    %995 = vmatprep.subr.mxu0 %v775
    %996 = vmatpush2.xpose.msra.mxu0 %v774
    %997 = vmatprep.subr.mxu0 %v771
    %998 = vmatpush2.xpose.msra.mxu0 %v770
    %999 = vmatprep.mubr.f32.mxu0 %v859
    %1000 = vmatmul.mubr.f32.gmra.mxu0 %v855
    %v1001 = vpop.f32.mrf.mxu0
    %v1002 = vadd.f32 %v931, %v1001
    %v1003 = vpop.f32.mrf.mxu0
    %v1004 = vadd.f32 %v933, %v1003
    %1005 = vdwg.mxu0
    %v1008 = vcombine.low %v1002, %v1004
    %v1010 = vunpack.c.l.s4 1966171168
    %v1011 = vunpack.c.0.s8 %v1010
    %v1012 = vlaneseq
    %v1013 = vshrl.u32 %v1012, 7
    %v1014 = vsub.s32 %v1011, %v1013
    %v1015 = vrot.slane %v1008, %v1014
    %v1017 = vunpack.c.l.s4 1966171168
    %v1018 = vunpack.c.0.s8 %v1017
    %v1019 = vlaneseq
    %v1020 = vshrl.u32 %v1019, 7
    %v1021 = vsub.s32 %v1018, %v1020
    %v1022 = vrot.slane %v1015, %v1021
    %v1024 = vlaneseq
    %vm1025 = vcmp.ge.s32.totalorder %v1024, 0
    %vm1026 = vcmp.lt.s32.totalorder %v1024, 256
    %vm1027 = vmand %vm1025, %vm1026
    %1028 = vst.msk [vmem:[#allocation3] sm:$0x3] %vm1027, %v1022
    // Predicated region
    $region22: #{tpu_custom_call.1} parent=1 // pred_check
      _
    $region23: #{tpu_custom_call.1} parent=1 // pred_check_branch
      %1030 = sbr.rel (0) target = $region25
    $region24: #{tpu_custom_call.1} parent=1 // pred_region
      %s1032 = ssub.s32 32, 32
      %1033 = vsyncadd [#allocation4], %s1032
      %s1035 = sshll.u32 [#allocation3], 4
      %s1036 = int_to_ptr.vmem [resolvable:$true] %s1035
      %1038 = dma.vmem_to_hbm [thread:$0]  %s1036, 32, %s5, [#allocation4]
    $region25: #{tpu_custom_call.1} parent=1 // pred_fallthru
      _
    // Predicated region
    $region26: #{tpu_custom_call.1} parent=1 // pred_check
      _
    $region27: #{tpu_custom_call.1} parent=1 // pred_check_branch
      %1040 = sbr.rel (0) target = $region29
    $region28: #{tpu_custom_call.1} parent=1 // pred_region
      %1041 = dma.done [#allocation4], 32
    $region29: #{tpu_custom_call.1} parent=1 // pred_fallthru
      _
    %1042 = vsyncpa [#allocation4], 1

// kernel: tpu_custom_call.1
$region0: #{tpu_custom_call.1}
  #allocation0 [shape = 'u32[]', space=smem, size = 0x4, offset = 0x4, fixed_abs, tag = 'smem constant byte address 0x4 - core index']
  #allocation1 [shape = 'u32[144,128]{1,0:T(1,128)}', space=vmem, size = 0x12000, scoped, tag = 'internal scratch']
  #allocation2 [shape = 'f32[1,1]{1,0:T(1,128)S(1)}', space=vmem, size = 0x200, scoped, tag = 'scoped memory for tpu_custom_call.1']
  %s0 = inlined_call_operand.vmem [shape: f32[256,32], index: 0, kind: input, shape index: {}]
  %s1 = inlined_call_operand.vmem [shape: f32[32,512], index: 1, kind: input, shape index: {}]
  %s2 = inlined_call_operand.vmem [shape: f32[1,512], index: 2, kind: input, shape index: {}]
  %s3 = inlined_call_operand.vmem [shape: f32[1,512], index: 3, kind: input, shape index: {}]
  %s4 = inlined_call_operand.<no memory space> [shape: f32[1,1], index: 4, kind: input, shape index: {}]
  %s5 = inlined_call_operand.hbm [shape: f32[1,256], index: 5, kind: output, shape index: {}]
  %s6 = sld [smem:[#allocation0]]
  $region30: #{tpu_custom_call.1} parent=0
    _
  %s8 = ssub.s32 1, %s6
  %s9 = scalar_select 0, %s8, %s6
  %v10 = vstv %s4
  %11 = vst [vmem:[#allocation2] sm:$0x1] %v10
  $region1: #{tpu_custom_call.1} parent=0
    #allocation3 [shape = 'u8[1024]{0}', space=vmem, size = 0x400, scoped, tag = 'output window, operand 0, single buffered']
    #allocation4 [shape = 's32[1]{0}', space=sflag, size = 0x4, scoped, tag = 'scoped memory for tpu_custom_call.1']
    %12 = vsyncpa [#allocation4], 0
    // Predicated region
    $region2: #{tpu_custom_call.1} parent=1 // pred_check
      _
    $region3: #{tpu_custom_call.1} parent=1 // pred_check_branch
      %14 = sbr.rel (0) target = $region5
    $region4: #{tpu_custom_call.1} parent=1 // pred_region
      _
    $region5: #{tpu_custom_call.1} parent=1 // pred_fallthru
      _
    // Predicated region
    $region6: #{tpu_custom_call.1} parent=1 // pred_check
      _
    $region7: #{tpu_custom_call.1} parent=1 // pred_check_branch
      %16 = sbr.rel (0) target = $region9
    $region8: #{tpu_custom_call.1} parent=1 // pred_region
      _
    $region9: #{tpu_custom_call.1} parent=1 // pred_fallthru
      _
    // Predicated region
    $region10: #{tpu_custom_call.1} parent=1 // pred_check
      _
    $region11: #{tpu_custom_call.1} parent=1 // pred_check_branch
      %18 = sbr.rel (0) target = $region13
    $region12: #{tpu_custom_call.1} parent=1 // pred_region
      _
    $region13: #{tpu_custom_call.1} parent=1 // pred_fallthru
      _
    // Predicated region
    $region14: #{tpu_custom_call.1} parent=1 // pred_check
      _
    $region15: #{tpu_custom_call.1} parent=1 // pred_check_branch
      %20 = sbr.rel (0) target = $region17
    $region16: #{tpu_custom_call.1} parent=1 // pred_region
      _
    $region17: #{tpu_custom_call.1} parent=1 // pred_fallthru
      _
    // Predicated region
    $region18: #{tpu_custom_call.1} parent=1 // pred_check
      _
    $region19: #{tpu_custom_call.1} parent=1 // pred_check_branch
      %22 = sbr.rel (0) target = $region21
    $region20: #{tpu_custom_call.1} parent=1 // pred_region
      _
    $region21: #{tpu_custom_call.1} parent=1 // pred_fallthru
      _
    %v23 = vld [vmem:[%s1] sm:$0xff]
    %v24 = vld [vmem:[%s1 + $0x8] sm:$0xff]
    %v25 = vld [vmem:[%s1 + $0x10] sm:$0xff]
    %v26 = vld [vmem:[%s1 + $0x18] sm:$0xff]
    %v27 = vld [vmem:[%s1 + $0x20] sm:$0xff]
    %v28 = vld [vmem:[%s1 + $0x28] sm:$0xff]
    %v29 = vld [vmem:[%s1 + $0x30] sm:$0xff]
    %v30 = vld [vmem:[%s1 + $0x38] sm:$0xff]
    %v31 = vld [vmem:[%s1 + $0x40] sm:$0xff]
    %v32 = vld [vmem:[%s1 + $0x48] sm:$0xff]
    %v33 = vld [vmem:[%s1 + $0x50] sm:$0xff]
    %v34 = vld [vmem:[%s1 + $0x58] sm:$0xff]
    %v35 = vld [vmem:[%s1 + $0x60] sm:$0xff]
    %v36 = vld [vmem:[%s1 + $0x68] sm:$0xff]
    %v37 = vld [vmem:[%s1 + $0x70] sm:$0xff]
    %v38 = vld [vmem:[%s1 + $0x78] sm:$0xff]
    %v39 = vld [vmem:[%s0] sm:$0xff]
    %v40 = vld [vmem:[%s0 + $0x8] sm:$0xff]
    %v41 = vld [vmem:[%s0 + $0x10] sm:$0xff]
    %v42 = vld [vmem:[%s0 + $0x18] sm:$0xff]
    %v43 = vld [vmem:[%s0 + $0x20] sm:$0xff]
    %v44 = vld [vmem:[%s0 + $0x28] sm:$0xff]
    %v45 = vld [vmem:[%s0 + $0x30] sm:$0xff]
    %v46 = vld [vmem:[%s0 + $0x38] sm:$0xff]
    %v47 = vld [vmem:[%s0 + $0x40] sm:$0xff]
    %v48 = vld [vmem:[%s0 + $0x48] sm:$0xff]
    %v49 = vld [vmem:[%s0 + $0x50] sm:$0xff]
    %v50 = vld [vmem:[%s0 + $0x58] sm:$0xff]
    %v51 = vld [vmem:[%s0 + $0x60] sm:$0xff]
    %v52 = vld [vmem:[%s0 + $0x68] sm:$0xff]
    %v53 = vld [vmem:[%s0 + $0x70] sm:$0xff]
    %v54 = vld [vmem:[%s0 + $0x78] sm:$0xff]
    %v55 = vld [vmem:[%s0 + $0x80] sm:$0xff]
    %v56 = vld [vmem:[%s0 + $0x88] sm:$0xff]
    %v57 = vld [vmem:[%s0 + $0x90] sm:$0xff]
    %v58 = vld [vmem:[%s0 + $0x98] sm:$0xff]
    %v59 = vld [vmem:[%s0 + $0xa0] sm:$0xff]
    %v60 = vld [vmem:[%s0 + $0xa8] sm:$0xff]
    %v61 = vld [vmem:[%s0 + $0xb0] sm:$0xff]
    %v62 = vld [vmem:[%s0 + $0xb8] sm:$0xff]
    %v63 = vld [vmem:[%s0 + $0xc0] sm:$0xff]
    %v64 = vld [vmem:[%s0 + $0xc8] sm:$0xff]
    %v65 = vld [vmem:[%s0 + $0xd0] sm:$0xff]
    %v66 = vld [vmem:[%s0 + $0xd8] sm:$0xff]
    %v67 = vld [vmem:[%s0 + $0xe0] sm:$0xff]
    %v68 = vld [vmem:[%s0 + $0xe8] sm:$0xff]
    %v69 = vld [vmem:[%s0 + $0xf0] sm:$0xff]
    %v70 = vld [vmem:[%s0 + $0xf8] sm:$0xff]
    %v71 = vld [vmem:[%s2] sm:$0xf]
    %v73 = vlaneseq
    %v74 = vshrl.u32 %v73, 7
    %v75 = vsub.s32 0, %v74
    %v76 = vrot.slane %v71, %v75
    %v77 = vlaneseq
    %v78 = vshrl.u32 %v77, 7
    %v79 = vsub.s32 1, %v78
    %v80 = vrot.slane %v71, %v79
    %v81 = vlaneseq
    %v82 = vshrl.u32 %v81, 7
    %v83 = vsub.s32 2, %v82
    %v84 = vrot.slane %v71, %v83
    %v85 = vlaneseq
    %v86 = vshrl.u32 %v85, 7
    %v87 = vsub.s32 3, %v86
    %v88 = vrot.slane %v71, %v87
    %vm93 = vcmask 261120
    %v95 = vsel %vm93, %v39, 0
    %v98 = vsel %vm93, %v40, 0
    %v101 = vsel %vm93, %v41, 0
    %v104 = vsel %vm93, %v42, 0
    %v107 = vsel %vm93, %v43, 0
    %v110 = vsel %vm93, %v44, 0
    %v113 = vsel %vm93, %v45, 0
    %v116 = vsel %vm93, %v46, 0
    %v119 = vsel %vm93, %v47, 0
    %v122 = vsel %vm93, %v48, 0
    %v125 = vsel %vm93, %v49, 0
    %v128 = vsel %vm93, %v50, 0
    %v131 = vsel %vm93, %v51, 0
    %v134 = vsel %vm93, %v52, 0
    %v137 = vsel %vm93, %v53, 0
    %v140 = vsel %vm93, %v54, 0
    %v143 = vsel %vm93, %v55, 0
    %v146 = vsel %vm93, %v56, 0
    %v149 = vsel %vm93, %v57, 0
    %v152 = vsel %vm93, %v58, 0
    %v155 = vsel %vm93, %v59, 0
    %v158 = vsel %vm93, %v60, 0
    %v161 = vsel %vm93, %v61, 0
    %v164 = vsel %vm93, %v62, 0
    %v167 = vsel %vm93, %v63, 0
    %v170 = vsel %vm93, %v64, 0
    %v173 = vsel %vm93, %v65, 0
    %v176 = vsel %vm93, %v66, 0
    %v179 = vsel %vm93, %v67, 0
    %v182 = vsel %vm93, %v68, 0
    %v185 = vsel %vm93, %v69, 0
    %v188 = vsel %vm93, %v70, 0
    %190 = vmatprep.subr.mxu0 0.0
    %191 = vmatpush1.msra.mxu0 0.0
    %192 = vmatprep.subr.mxu0 0.0
    %193 = vmatpush1.msra.mxu0 0.0
    %194 = vmatprep.subr.mxu0 0.0
    %195 = vmatpush1.msra.mxu0 0.0
    %196 = vmatprep.subr.mxu0 0.0
    %197 = vmatpush1.msra.mxu0 0.0
    %198 = vmatprep.subr.mxu0 0.0
    %199 = vmatpush1.msra.mxu0 0.0
    %200 = vmatprep.subr.mxu0 0.0
    %201 = vmatpush1.msra.mxu0 0.0
    %202 = vmatprep.subr.mxu0 0.0
    %203 = vmatpush1.msra.mxu0 0.0
    %204 = vmatprep.subr.mxu0 0.0
    %205 = vmatpush1.msra.mxu0 0.0
    %206 = vmatprep.subr.mxu0 0.0
    %207 = vmatpush1.msra.mxu0 0.0
    %208 = vmatprep.subr.mxu0 0.0
    %209 = vmatpush1.msra.mxu0 0.0
    %210 = vmatprep.subr.mxu0 0.0
    %211 = vmatpush1.msra.mxu0 0.0
    %212 = vmatprep.subr.mxu0 0.0
    %213 = vmatpush1.msra.mxu0 0.0
    %214 = vmatprep.subr.mxu0 %v36
    %215 = vmatpush1.msra.mxu0 %v35
    %216 = vmatprep.subr.mxu0 %v32
    %217 = vmatpush1.msra.mxu0 %v31
    %218 = vmatprep.subr.mxu0 %v28
    %219 = vmatpush1.msra.mxu0 %v27
    %220 = vmatprep.subr.mxu0 %v24
    %221 = vmatpush1.msra.mxu0 %v23
    %222 = vmatprep.subr.mxu0 0.0
    %223 = vmatpush2.msra.mxu0 0.0
    %224 = vmatprep.subr.mxu0 0.0
    %225 = vmatpush2.msra.mxu0 0.0
    %226 = vmatprep.subr.mxu0 0.0
    %227 = vmatpush2.msra.mxu0 0.0
    %228 = vmatprep.subr.mxu0 0.0
    %229 = vmatpush2.msra.mxu0 0.0
    %230 = vmatprep.subr.mxu0 0.0
    %231 = vmatpush2.msra.mxu0 0.0
    %232 = vmatprep.subr.mxu0 0.0
    %233 = vmatpush2.msra.mxu0 0.0
    %234 = vmatprep.subr.mxu0 0.0
    %235 = vmatpush2.msra.mxu0 0.0
    %236 = vmatprep.subr.mxu0 0.0
    %237 = vmatpush2.msra.mxu0 0.0
    %238 = vmatprep.subr.mxu0 0.0
    %239 = vmatpush2.msra.mxu0 0.0
    %240 = vmatprep.subr.mxu0 0.0
    %241 = vmatpush2.msra.mxu0 0.0
    %242 = vmatprep.subr.mxu0 0.0
    %243 = vmatpush2.msra.mxu0 0.0
    %244 = vmatprep.subr.mxu0 0.0
    %245 = vmatpush2.msra.mxu0 0.0
    %246 = vmatprep.subr.mxu0 0.0
    %247 = vmatpush2.msra.mxu0 0.0
    %248 = vmatprep.subr.mxu0 0.0
    %249 = vmatpush2.msra.mxu0 0.0
    %250 = vmatprep.subr.mxu0 0.0
    %251 = vmatpush2.msra.mxu0 0.0
    %252 = vmatprep.subr.mxu0 0.0
    %253 = vmatpush2.msra.mxu0 0.0
    %254 = vmatprep.mubr.f32.mxu0 0.0
    %255 = vmatmul.mubr.f32.gmra.mxu0 %v95
    %v256 = vpop.f32.mrf.mxu0
    %v257 = vadd.f32 %v76, %v256
    %v258 = vpop.f32.mrf.mxu0
    %v259 = vadd.f32 %v80, %v258
    %260 = vmatprep.mubr.f32.mxu0 0.0
    %261 = vmatmul.mubr.f32.gmra.mxu0 %v98
    %v262 = vpop.f32.mrf.mxu0
    %v263 = vadd.f32 %v76, %v262
    %v264 = vpop.f32.mrf.mxu0
    %v265 = vadd.f32 %v80, %v264
    %266 = vmatprep.mubr.f32.mxu0 0.0
    %267 = vmatmul.mubr.f32.gmra.mxu0 %v101
    %v268 = vpop.f32.mrf.mxu0
    %v269 = vadd.f32 %v76, %v268
    %v270 = vpop.f32.mrf.mxu0
    %v271 = vadd.f32 %v80, %v270
    %272 = vmatprep.mubr.f32.mxu0 0.0
    %273 = vmatmul.mubr.f32.gmra.mxu0 %v104
    %v274 = vpop.f32.mrf.mxu0
    %v275 = vadd.f32 %v76, %v274
    %v276 = vpop.f32.mrf.mxu0
    %v277 = vadd.f32 %v80, %v276
    %278 = vmatprep.mubr.f32.mxu0 0.0
    %279 = vmatmul.mubr.f32.gmra.mxu0 %v107
    %v280 = vpop.f32.mrf.mxu0
    %v281 = vadd.f32 %v76, %v280
    %v282 = vpop.f32.mrf.mxu0
    %v283 = vadd.f32 %v80, %v282
    %284 = vmatprep.mubr.f32.mxu0 0.0
    %285 = vmatmul.mubr.f32.gmra.mxu0 %v110
    %v286 = vpop.f32.mrf.mxu0
    %v287 = vadd.f32 %v76, %v286
    %v288 = vpop.f32.mrf.mxu0
    %v289 = vadd.f32 %v80, %v288
    %290 = vmatprep.mubr.f32.mxu0 0.0
    %291 = vmatmul.mubr.f32.gmra.mxu0 %v113
    %v292 = vpop.f32.mrf.mxu0
    %v293 = vadd.f32 %v76, %v292
    %v294 = vpop.f32.mrf.mxu0
    %v295 = vadd.f32 %v80, %v294
    %296 = vmatprep.mubr.f32.mxu0 0.0
    %297 = vmatmul.mubr.f32.gmra.mxu0 %v116
    %v298 = vpop.f32.mrf.mxu0
    %v299 = vadd.f32 %v76, %v298
    %v300 = vpop.f32.mrf.mxu0
    %v301 = vadd.f32 %v80, %v300
    %302 = vmatprep.mubr.f32.mxu0 0.0
    %303 = vmatmul.mubr.f32.gmra.mxu0 %v119
    %v304 = vpop.f32.mrf.mxu0
    %v305 = vadd.f32 %v76, %v304
    %v306 = vpop.f32.mrf.mxu0
    %v307 = vadd.f32 %v80, %v306
    %308 = vmatprep.mubr.f32.mxu0 0.0
    %309 = vmatmul.mubr.f32.gmra.mxu0 %v122
    %v310 = vpop.f32.mrf.mxu0
    %v311 = vadd.f32 %v76, %v310
    %v312 = vpop.f32.mrf.mxu0
    %v313 = vadd.f32 %v80, %v312
    %314 = vmatprep.mubr.f32.mxu0 0.0
    %315 = vmatmul.mubr.f32.gmra.mxu0 %v125
    %v316 = vpop.f32.mrf.mxu0
    %v317 = vadd.f32 %v76, %v316
    %v318 = vpop.f32.mrf.mxu0
    %v319 = vadd.f32 %v80, %v318
    %320 = vmatprep.mubr.f32.mxu0 0.0
    %321 = vmatmul.mubr.f32.gmra.mxu0 %v128
    %v322 = vpop.f32.mrf.mxu0
    %v323 = vadd.f32 %v76, %v322
    %v324 = vpop.f32.mrf.mxu0
    %v325 = vadd.f32 %v80, %v324
    %326 = vmatprep.mubr.f32.mxu0 0.0
    %327 = vmatmul.mubr.f32.gmra.mxu0 %v131
    %v328 = vpop.f32.mrf.mxu0
    %v329 = vadd.f32 %v76, %v328
    %v330 = vpop.f32.mrf.mxu0
    %v331 = vadd.f32 %v80, %v330
    %332 = vmatprep.mubr.f32.mxu0 0.0
    %333 = vmatmul.mubr.f32.gmra.mxu0 %v134
    %v334 = vpop.f32.mrf.mxu0
    %v335 = vadd.f32 %v76, %v334
    %v336 = vpop.f32.mrf.mxu0
    %v337 = vadd.f32 %v80, %v336
    %338 = vmatprep.mubr.f32.mxu0 0.0
    %339 = vmatmul.mubr.f32.gmra.mxu0 %v137
    %v340 = vpop.f32.mrf.mxu0
    %v341 = vadd.f32 %v76, %v340
    %v342 = vpop.f32.mrf.mxu0
    %v343 = vadd.f32 %v80, %v342
    %344 = vmatprep.mubr.f32.mxu0 0.0
    %345 = vmatmul.mubr.f32.gmra.mxu0 %v140
    %v346 = vpop.f32.mrf.mxu0
    %v347 = vadd.f32 %v76, %v346
    %v348 = vpop.f32.mrf.mxu0
    %v349 = vadd.f32 %v80, %v348
    %350 = vmatprep.mubr.f32.mxu0 0.0
    %351 = vmatmul.mubr.f32.gmra.mxu0 %v143
    %v352 = vpop.f32.mrf.mxu0
    %v353 = vadd.f32 %v76, %v352
    %v354 = vpop.f32.mrf.mxu0
    %v355 = vadd.f32 %v80, %v354
    %356 = vmatprep.mubr.f32.mxu0 0.0
    %357 = vmatmul.mubr.f32.gmra.mxu0 %v146
    %v358 = vpop.f32.mrf.mxu0
    %v359 = vadd.f32 %v76, %v358
    %v360 = vpop.f32.mrf.mxu0
    %v361 = vadd.f32 %v80, %v360
    %362 = vmatprep.mubr.f32.mxu0 0.0
    %363 = vmatmul.mubr.f32.gmra.mxu0 %v149
    %v364 = vpop.f32.mrf.mxu0
    %v365 = vadd.f32 %v76, %v364
    %v366 = vpop.f32.mrf.mxu0
    %v367 = vadd.f32 %v80, %v366
    %368 = vmatprep.mubr.f32.mxu0 0.0
    %369 = vmatmul.mubr.f32.gmra.mxu0 %v152
    %v370 = vpop.f32.mrf.mxu0
    %v371 = vadd.f32 %v76, %v370
    %v372 = vpop.f32.mrf.mxu0
    %v373 = vadd.f32 %v80, %v372
    %374 = vmatprep.mubr.f32.mxu0 0.0
    %375 = vmatmul.mubr.f32.gmra.mxu0 %v155
    %v376 = vpop.f32.mrf.mxu0
    %v377 = vadd.f32 %v76, %v376
    %v378 = vpop.f32.mrf.mxu0
    %v379 = vadd.f32 %v80, %v378
    %380 = vmatprep.mubr.f32.mxu0 0.0
    %381 = vmatmul.mubr.f32.gmra.mxu0 %v158
    %v382 = vpop.f32.mrf.mxu0
    %v383 = vadd.f32 %v76, %v382
    %v384 = vpop.f32.mrf.mxu0
    %v385 = vadd.f32 %v80, %v384
    %386 = vmatprep.mubr.f32.mxu0 0.0
    %387 = vmatmul.mubr.f32.gmra.mxu0 %v161
    %v388 = vpop.f32.mrf.mxu0
    %v389 = vadd.f32 %v76, %v388
    %v390 = vpop.f32.mrf.mxu0
    %v391 = vadd.f32 %v80, %v390
    %392 = vmatprep.mubr.f32.mxu0 0.0
    %393 = vmatmul.mubr.f32.gmra.mxu0 %v164
    %v394 = vpop.f32.mrf.mxu0
    %v395 = vadd.f32 %v76, %v394
    %v396 = vpop.f32.mrf.mxu0
    %v397 = vadd.f32 %v80, %v396
    %398 = vmatprep.mubr.f32.mxu0 0.0
    %399 = vmatmul.mubr.f32.gmra.mxu0 %v167
    %v400 = vpop.f32.mrf.mxu0
    %v401 = vadd.f32 %v76, %v400
    %v402 = vpop.f32.mrf.mxu0
    %v403 = vadd.f32 %v80, %v402
    %404 = vmatprep.mubr.f32.mxu0 0.0
    %405 = vmatmul.mubr.f32.gmra.mxu0 %v170
    %v406 = vpop.f32.mrf.mxu0
    %v407 = vadd.f32 %v76, %v406
    %v408 = vpop.f32.mrf.mxu0
    %v409 = vadd.f32 %v80, %v408
    %410 = vmatprep.mubr.f32.mxu0 0.0
    %411 = vmatmul.mubr.f32.gmra.mxu0 %v173
    %v412 = vpop.f32.mrf.mxu0
    %v413 = vadd.f32 %v76, %v412
    %v414 = vpop.f32.mrf.mxu0
    %v415 = vadd.f32 %v80, %v414
    %416 = vmatprep.mubr.f32.mxu0 0.0
    %417 = vmatmul.mubr.f32.gmra.mxu0 %v176
    %v418 = vpop.f32.mrf.mxu0
    %v419 = vadd.f32 %v76, %v418
    %v420 = vpop.f32.mrf.mxu0
    %v421 = vadd.f32 %v80, %v420
    %422 = vmatprep.mubr.f32.mxu0 0.0
    %423 = vmatmul.mubr.f32.gmra.mxu0 %v179
    %v424 = vpop.f32.mrf.mxu0
    %v425 = vadd.f32 %v76, %v424
    %v426 = vpop.f32.mrf.mxu0
    %v427 = vadd.f32 %v80, %v426
    %428 = vmatprep.mubr.f32.mxu0 0.0
    %429 = vmatmul.mubr.f32.gmra.mxu0 %v182
    %v430 = vpop.f32.mrf.mxu0
    %v431 = vadd.f32 %v76, %v430
    %v432 = vpop.f32.mrf.mxu0
    %v433 = vadd.f32 %v80, %v432
    %434 = vmatprep.mubr.f32.mxu0 0.0
    %435 = vmatmul.mubr.f32.gmra.mxu0 %v185
    %v436 = vpop.f32.mrf.mxu0
    %v437 = vadd.f32 %v76, %v436
    %v438 = vpop.f32.mrf.mxu0
    %v439 = vadd.f32 %v80, %v438
    %440 = vmatprep.mubr.f32.mxu0 0.0
    %441 = vmatmul.mubr.f32.gmra.mxu0 %v188
    %v442 = vpop.f32.mrf.mxu0
    %v443 = vadd.f32 %v76, %v442
    %v444 = vpop.f32.mrf.mxu0
    %v445 = vadd.f32 %v80, %v444
    %446 = vdwg.mxu0
    %447 = vmatprep.subr.mxu0 0.0
    %448 = vmatpush1.msra.mxu0 0.0
    %449 = vmatprep.subr.mxu0 0.0
    %450 = vmatpush1.msra.mxu0 0.0
    %451 = vmatprep.subr.mxu0 0.0
    %452 = vmatpush1.msra.mxu0 0.0
    %453 = vmatprep.subr.mxu0 0.0
    %454 = vmatpush1.msra.mxu0 0.0
    %455 = vmatprep.subr.mxu0 0.0
    %456 = vmatpush1.msra.mxu0 0.0
    %457 = vmatprep.subr.mxu0 0.0
    %458 = vmatpush1.msra.mxu0 0.0
    %459 = vmatprep.subr.mxu0 0.0
    %460 = vmatpush1.msra.mxu0 0.0
    %461 = vmatprep.subr.mxu0 0.0
    %462 = vmatpush1.msra.mxu0 0.0
    %463 = vmatprep.subr.mxu0 0.0
    %464 = vmatpush1.msra.mxu0 0.0
    %465 = vmatprep.subr.mxu0 0.0
    %466 = vmatpush1.msra.mxu0 0.0
    %467 = vmatprep.subr.mxu0 0.0
    %468 = vmatpush1.msra.mxu0 0.0
    %469 = vmatprep.subr.mxu0 0.0
    %470 = vmatpush1.msra.mxu0 0.0
    %471 = vmatprep.subr.mxu0 %v38
    %472 = vmatpush1.msra.mxu0 %v37
    %473 = vmatprep.subr.mxu0 %v34
    %474 = vmatpush1.msra.mxu0 %v33
    %475 = vmatprep.subr.mxu0 %v30
    %476 = vmatpush1.msra.mxu0 %v29
    %477 = vmatprep.subr.mxu0 %v26
    %478 = vmatpush1.msra.mxu0 %v25
    %479 = vmatprep.subr.mxu0 0.0
    %480 = vmatpush2.msra.mxu0 0.0
    %481 = vmatprep.subr.mxu0 0.0
    %482 = vmatpush2.msra.mxu0 0.0
    %483 = vmatprep.subr.mxu0 0.0
    %484 = vmatpush2.msra.mxu0 0.0
    %485 = vmatprep.subr.mxu0 0.0
    %486 = vmatpush2.msra.mxu0 0.0
    %487 = vmatprep.subr.mxu0 0.0
    %488 = vmatpush2.msra.mxu0 0.0
    %489 = vmatprep.subr.mxu0 0.0
    %490 = vmatpush2.msra.mxu0 0.0
    %491 = vmatprep.subr.mxu0 0.0
    %492 = vmatpush2.msra.mxu0 0.0
    %493 = vmatprep.subr.mxu0 0.0
    %494 = vmatpush2.msra.mxu0 0.0
    %495 = vmatprep.subr.mxu0 0.0
    %496 = vmatpush2.msra.mxu0 0.0
    %497 = vmatprep.subr.mxu0 0.0
    %498 = vmatpush2.msra.mxu0 0.0
    %499 = vmatprep.subr.mxu0 0.0
    %500 = vmatpush2.msra.mxu0 0.0
    %501 = vmatprep.subr.mxu0 0.0
    %502 = vmatpush2.msra.mxu0 0.0
    %503 = vmatprep.subr.mxu0 0.0
    %504 = vmatpush2.msra.mxu0 0.0
    %505 = vmatprep.subr.mxu0 0.0
    %506 = vmatpush2.msra.mxu0 0.0
    %507 = vmatprep.subr.mxu0 0.0
    %508 = vmatpush2.msra.mxu0 0.0
    %509 = vmatprep.subr.mxu0 0.0
    %510 = vmatpush2.msra.mxu0 0.0
    %511 = vmatprep.mubr.f32.mxu0 0.0
    %512 = vmatmul.mubr.f32.gmra.mxu0 %v95
    %v513 = vpop.f32.mrf.mxu0
    %v514 = vadd.f32 %v84, %v513
    %v515 = vpop.f32.mrf.mxu0
    %v516 = vadd.f32 %v88, %v515
    %517 = vmatprep.mubr.f32.mxu0 0.0
    %518 = vmatmul.mubr.f32.gmra.mxu0 %v98
    %v519 = vpop.f32.mrf.mxu0
    %v520 = vadd.f32 %v84, %v519
    %v521 = vpop.f32.mrf.mxu0
    %v522 = vadd.f32 %v88, %v521
    %523 = vmatprep.mubr.f32.mxu0 0.0
    %524 = vmatmul.mubr.f32.gmra.mxu0 %v101
    %v525 = vpop.f32.mrf.mxu0
    %v526 = vadd.f32 %v84, %v525
    %v527 = vpop.f32.mrf.mxu0
    %v528 = vadd.f32 %v88, %v527
    %529 = vmatprep.mubr.f32.mxu0 0.0
    %530 = vmatmul.mubr.f32.gmra.mxu0 %v104
    %v531 = vpop.f32.mrf.mxu0
    %v532 = vadd.f32 %v84, %v531
    %v533 = vpop.f32.mrf.mxu0
    %v534 = vadd.f32 %v88, %v533
    %535 = vmatprep.mubr.f32.mxu0 0.0
    %536 = vmatmul.mubr.f32.gmra.mxu0 %v107
    %v537 = vpop.f32.mrf.mxu0
    %v538 = vadd.f32 %v84, %v537
    %v539 = vpop.f32.mrf.mxu0
    %v540 = vadd.f32 %v88, %v539
    %541 = vmatprep.mubr.f32.mxu0 0.0
    %542 = vmatmul.mubr.f32.gmra.mxu0 %v110
    %v543 = vpop.f32.mrf.mxu0
    %v544 = vadd.f32 %v84, %v543
    %v545 = vpop.f32.mrf.mxu0
    %v546 = vadd.f32 %v88, %v545
    %547 = vmatprep.mubr.f32.mxu0 0.0
    %548 = vmatmul.mubr.f32.gmra.mxu0 %v113
    %v549 = vpop.f32.mrf.mxu0
    %v550 = vadd.f32 %v84, %v549
    %v551 = vpop.f32.mrf.mxu0
    %v552 = vadd.f32 %v88, %v551
    %553 = vmatprep.mubr.f32.mxu0 0.0
    %554 = vmatmul.mubr.f32.gmra.mxu0 %v116
    %v555 = vpop.f32.mrf.mxu0
    %v556 = vadd.f32 %v84, %v555
    %v557 = vpop.f32.mrf.mxu0
    %v558 = vadd.f32 %v88, %v557
    %559 = vmatprep.mubr.f32.mxu0 0.0
    %560 = vmatmul.mubr.f32.gmra.mxu0 %v119
    %v561 = vpop.f32.mrf.mxu0
    %v562 = vadd.f32 %v84, %v561
    %v563 = vpop.f32.mrf.mxu0
    %v564 = vadd.f32 %v88, %v563
    %565 = vmatprep.mubr.f32.mxu0 0.0
    %566 = vmatmul.mubr.f32.gmra.mxu0 %v122
    %v567 = vpop.f32.mrf.mxu0
    %v568 = vadd.f32 %v84, %v567
    %v569 = vpop.f32.mrf.mxu0
    %v570 = vadd.f32 %v88, %v569
    %571 = vmatprep.mubr.f32.mxu0 0.0
    %572 = vmatmul.mubr.f32.gmra.mxu0 %v125
    %v573 = vpop.f32.mrf.mxu0
    %v574 = vadd.f32 %v84, %v573
    %v575 = vpop.f32.mrf.mxu0
    %v576 = vadd.f32 %v88, %v575
    %577 = vmatprep.mubr.f32.mxu0 0.0
    %578 = vmatmul.mubr.f32.gmra.mxu0 %v128
    %v579 = vpop.f32.mrf.mxu0
    %v580 = vadd.f32 %v84, %v579
    %v581 = vpop.f32.mrf.mxu0
    %v582 = vadd.f32 %v88, %v581
    %583 = vmatprep.mubr.f32.mxu0 0.0
    %584 = vmatmul.mubr.f32.gmra.mxu0 %v131
    %v585 = vpop.f32.mrf.mxu0
    %v586 = vadd.f32 %v84, %v585
    %v587 = vpop.f32.mrf.mxu0
    %v588 = vadd.f32 %v88, %v587
    %589 = vmatprep.mubr.f32.mxu0 0.0
    %590 = vmatmul.mubr.f32.gmra.mxu0 %v134
    %v591 = vpop.f32.mrf.mxu0
    %v592 = vadd.f32 %v84, %v591
    %v593 = vpop.f32.mrf.mxu0
    %v594 = vadd.f32 %v88, %v593
    %595 = vmatprep.mubr.f32.mxu0 0.0
    %596 = vmatmul.mubr.f32.gmra.mxu0 %v137
    %v597 = vpop.f32.mrf.mxu0
    %v598 = vadd.f32 %v84, %v597
    %v599 = vpop.f32.mrf.mxu0
    %v600 = vadd.f32 %v88, %v599
    %601 = vmatprep.mubr.f32.mxu0 0.0
    %602 = vmatmul.mubr.f32.gmra.mxu0 %v140
    %v603 = vpop.f32.mrf.mxu0
    %v604 = vadd.f32 %v84, %v603
    %v605 = vpop.f32.mrf.mxu0
    %v606 = vadd.f32 %v88, %v605
    %607 = vmatprep.mubr.f32.mxu0 0.0
    %608 = vmatmul.mubr.f32.gmra.mxu0 %v143
    %v609 = vpop.f32.mrf.mxu0
    %v610 = vadd.f32 %v84, %v609
    %v611 = vpop.f32.mrf.mxu0
    %v612 = vadd.f32 %v88, %v611
    %613 = vmatprep.mubr.f32.mxu0 0.0
    %614 = vmatmul.mubr.f32.gmra.mxu0 %v146
    %v615 = vpop.f32.mrf.mxu0
    %v616 = vadd.f32 %v84, %v615
    %v617 = vpop.f32.mrf.mxu0
    %v618 = vadd.f32 %v88, %v617
    %619 = vmatprep.mubr.f32.mxu0 0.0
    %620 = vmatmul.mubr.f32.gmra.mxu0 %v149
    %v621 = vpop.f32.mrf.mxu0
    %v622 = vadd.f32 %v84, %v621
    %v623 = vpop.f32.mrf.mxu0
    %v624 = vadd.f32 %v88, %v623
    %625 = vmatprep.mubr.f32.mxu0 0.0
    %626 = vmatmul.mubr.f32.gmra.mxu0 %v152
    %v627 = vpop.f32.mrf.mxu0
    %v628 = vadd.f32 %v84, %v627
    %v629 = vpop.f32.mrf.mxu0
    %v630 = vadd.f32 %v88, %v629
    %631 = vmatprep.mubr.f32.mxu0 0.0
    %632 = vmatmul.mubr.f32.gmra.mxu0 %v155
    %v633 = vpop.f32.mrf.mxu0
    %v634 = vadd.f32 %v84, %v633
    %v635 = vpop.f32.mrf.mxu0
    %v636 = vadd.f32 %v88, %v635
    %637 = vmatprep.mubr.f32.mxu0 0.0
    %638 = vmatmul.mubr.f32.gmra.mxu0 %v158
    %v639 = vpop.f32.mrf.mxu0
    %v640 = vadd.f32 %v84, %v639
    %v641 = vpop.f32.mrf.mxu0
    %v642 = vadd.f32 %v88, %v641
    %643 = vmatprep.mubr.f32.mxu0 0.0
    %644 = vmatmul.mubr.f32.gmra.mxu0 %v161
    %v645 = vpop.f32.mrf.mxu0
    %v646 = vadd.f32 %v84, %v645
    %v647 = vpop.f32.mrf.mxu0
    %v648 = vadd.f32 %v88, %v647
    %649 = vmatprep.mubr.f32.mxu0 0.0
    %650 = vmatmul.mubr.f32.gmra.mxu0 %v164
    %v651 = vpop.f32.mrf.mxu0
    %v652 = vadd.f32 %v84, %v651
    %v653 = vpop.f32.mrf.mxu0
    %v654 = vadd.f32 %v88, %v653
    %655 = vmatprep.mubr.f32.mxu0 0.0
    %656 = vmatmul.mubr.f32.gmra.mxu0 %v167
    %v657 = vpop.f32.mrf.mxu0
    %v658 = vadd.f32 %v84, %v657
    %v659 = vpop.f32.mrf.mxu0
    %v660 = vadd.f32 %v88, %v659
    %661 = vmatprep.mubr.f32.mxu0 0.0
    %662 = vmatmul.mubr.f32.gmra.mxu0 %v170
    %v663 = vpop.f32.mrf.mxu0
    %v664 = vadd.f32 %v84, %v663
    %v665 = vpop.f32.mrf.mxu0
    %v666 = vadd.f32 %v88, %v665
    %667 = vmatprep.mubr.f32.mxu0 0.0
    %668 = vmatmul.mubr.f32.gmra.mxu0 %v173
    %v669 = vpop.f32.mrf.mxu0
    %v670 = vadd.f32 %v84, %v669
    %v671 = vpop.f32.mrf.mxu0
    %v672 = vadd.f32 %v88, %v671
    %673 = vmatprep.mubr.f32.mxu0 0.0
    %674 = vmatmul.mubr.f32.gmra.mxu0 %v176
    %v675 = vpop.f32.mrf.mxu0
    %v676 = vadd.f32 %v84, %v675
    %v677 = vpop.f32.mrf.mxu0
    %v678 = vadd.f32 %v88, %v677
    %679 = vmatprep.mubr.f32.mxu0 0.0
    %680 = vmatmul.mubr.f32.gmra.mxu0 %v179
    %v681 = vpop.f32.mrf.mxu0
    %v682 = vadd.f32 %v84, %v681
    %v683 = vpop.f32.mrf.mxu0
    %v684 = vadd.f32 %v88, %v683
    %685 = vmatprep.mubr.f32.mxu0 0.0
    %686 = vmatmul.mubr.f32.gmra.mxu0 %v182
    %v687 = vpop.f32.mrf.mxu0
    %v688 = vadd.f32 %v84, %v687
    %v689 = vpop.f32.mrf.mxu0
    %v690 = vadd.f32 %v88, %v689
    %691 = vmatprep.mubr.f32.mxu0 0.0
    %692 = vmatmul.mubr.f32.gmra.mxu0 %v185
    %v693 = vpop.f32.mrf.mxu0
    %v694 = vadd.f32 %v84, %v693
    %v695 = vpop.f32.mrf.mxu0
    %v696 = vadd.f32 %v88, %v695
    %697 = vmatprep.mubr.f32.mxu0 0.0
    %698 = vmatmul.mubr.f32.gmra.mxu0 %v188
    %v699 = vpop.f32.mrf.mxu0
    %v700 = vadd.f32 %v84, %v699
    %v701 = vpop.f32.mrf.mxu0
    %v702 = vadd.f32 %v88, %v701
    %703 = vdwg.mxu0
    %v704 = vmax.f32 %v257, 0.0
    %v705 = vmax.f32 %v259, 0.0
    %v706 = vmax.f32 %v514, 0.0
    %v707 = vmax.f32 %v516, 0.0
    %v708 = vmax.f32 %v263, 0.0
    %v709 = vmax.f32 %v265, 0.0
    %v710 = vmax.f32 %v520, 0.0
    %v711 = vmax.f32 %v522, 0.0
    %v712 = vmax.f32 %v269, 0.0
    %v713 = vmax.f32 %v271, 0.0
    %v714 = vmax.f32 %v526, 0.0
    %v715 = vmax.f32 %v528, 0.0
    %v716 = vmax.f32 %v275, 0.0
    %v717 = vmax.f32 %v277, 0.0
    %v718 = vmax.f32 %v532, 0.0
    %v719 = vmax.f32 %v534, 0.0
    %v720 = vmax.f32 %v281, 0.0
    %v721 = vmax.f32 %v283, 0.0
    %v722 = vmax.f32 %v538, 0.0
    %v723 = vmax.f32 %v540, 0.0
    %v724 = vmax.f32 %v287, 0.0
    %v725 = vmax.f32 %v289, 0.0
    %v726 = vmax.f32 %v544, 0.0
    %v727 = vmax.f32 %v546, 0.0
    %v728 = vmax.f32 %v293, 0.0
    %v729 = vmax.f32 %v295, 0.0
    %v730 = vmax.f32 %v550, 0.0
    %v731 = vmax.f32 %v552, 0.0
    %v732 = vmax.f32 %v299, 0.0
    %v733 = vmax.f32 %v301, 0.0
    %v734 = vmax.f32 %v556, 0.0
    %v735 = vmax.f32 %v558, 0.0
    %v736 = vmax.f32 %v305, 0.0
    %v737 = vmax.f32 %v307, 0.0
    %v738 = vmax.f32 %v562, 0.0
    %v739 = vmax.f32 %v564, 0.0
    %v740 = vmax.f32 %v311, 0.0
    %v741 = vmax.f32 %v313, 0.0
    %v742 = vmax.f32 %v568, 0.0
    %v743 = vmax.f32 %v570, 0.0
    %v744 = vmax.f32 %v317, 0.0
    %v745 = vmax.f32 %v319, 0.0
    %v746 = vmax.f32 %v574, 0.0
    %v747 = vmax.f32 %v576, 0.0
    %v748 = vmax.f32 %v323, 0.0
    %v749 = vmax.f32 %v325, 0.0
    %v750 = vmax.f32 %v580, 0.0
    %v751 = vmax.f32 %v582, 0.0
    %v752 = vmax.f32 %v329, 0.0
    %v753 = vmax.f32 %v331, 0.0
    %v754 = vmax.f32 %v586, 0.0
    %v755 = vmax.f32 %v588, 0.0
    %v756 = vmax.f32 %v335, 0.0
    %v757 = vmax.f32 %v337, 0.0
    %v758 = vmax.f32 %v592, 0.0
    %v759 = vmax.f32 %v594, 0.0
    %v760 = vmax.f32 %v341, 0.0
    %v761 = vmax.f32 %v343, 0.0
    %v762 = vmax.f32 %v598, 0.0
    %v763 = vmax.f32 %v600, 0.0
    %v764 = vmax.f32 %v347, 0.0
    %v765 = vmax.f32 %v349, 0.0
    %v766 = vmax.f32 %v604, 0.0
    %v767 = vmax.f32 %v606, 0.0
    %v768 = vmax.f32 %v353, 0.0
    %v769 = vmax.f32 %v355, 0.0
    %v770 = vmax.f32 %v610, 0.0
    %v771 = vmax.f32 %v612, 0.0
    %v772 = vmax.f32 %v359, 0.0
    %v773 = vmax.f32 %v361, 0.0
    %v774 = vmax.f32 %v616, 0.0
    %v775 = vmax.f32 %v618, 0.0
    %v776 = vmax.f32 %v365, 0.0
    %v777 = vmax.f32 %v367, 0.0
    %v778 = vmax.f32 %v622, 0.0
    %v779 = vmax.f32 %v624, 0.0
    %v780 = vmax.f32 %v371, 0.0
    %v781 = vmax.f32 %v373, 0.0
    %v782 = vmax.f32 %v628, 0.0
    %v783 = vmax.f32 %v630, 0.0
    %v784 = vmax.f32 %v377, 0.0
    %v785 = vmax.f32 %v379, 0.0
    %v786 = vmax.f32 %v634, 0.0
    %v787 = vmax.f32 %v636, 0.0
    %v788 = vmax.f32 %v383, 0.0
    %v789 = vmax.f32 %v385, 0.0
    %v790 = vmax.f32 %v640, 0.0
    %v791 = vmax.f32 %v642, 0.0
    %v792 = vmax.f32 %v389, 0.0
    %v793 = vmax.f32 %v391, 0.0
    %v794 = vmax.f32 %v646, 0.0
    %v795 = vmax.f32 %v648, 0.0
    %v796 = vmax.f32 %v395, 0.0
    %v797 = vmax.f32 %v397, 0.0
    %v798 = vmax.f32 %v652, 0.0
    %v799 = vmax.f32 %v654, 0.0
    %v800 = vmax.f32 %v401, 0.0
    %v801 = vmax.f32 %v403, 0.0
    %v802 = vmax.f32 %v658, 0.0
    %v803 = vmax.f32 %v660, 0.0
    %v804 = vmax.f32 %v407, 0.0
    %v805 = vmax.f32 %v409, 0.0
    %v806 = vmax.f32 %v664, 0.0
    %v807 = vmax.f32 %v666, 0.0
    %v808 = vmax.f32 %v413, 0.0
    %v809 = vmax.f32 %v415, 0.0
    %v810 = vmax.f32 %v670, 0.0
    %v811 = vmax.f32 %v672, 0.0
    %v812 = vmax.f32 %v419, 0.0
    %v813 = vmax.f32 %v421, 0.0
    %v814 = vmax.f32 %v676, 0.0
    %v815 = vmax.f32 %v678, 0.0
    %v816 = vmax.f32 %v425, 0.0
    %v817 = vmax.f32 %v427, 0.0
    %v818 = vmax.f32 %v682, 0.0
    %v819 = vmax.f32 %v684, 0.0
    %v820 = vmax.f32 %v431, 0.0
    %v821 = vmax.f32 %v433, 0.0
    %v822 = vmax.f32 %v688, 0.0
    %v823 = vmax.f32 %v690, 0.0
    %v824 = vmax.f32 %v437, 0.0
    %v825 = vmax.f32 %v439, 0.0
    %v826 = vmax.f32 %v694, 0.0
    %v827 = vmax.f32 %v696, 0.0
    %v828 = vmax.f32 %v443, 0.0
    %v829 = vmax.f32 %v445, 0.0
    %v830 = vmax.f32 %v700, 0.0
    %v831 = vmax.f32 %v702, 0.0
    %v832 = vld [vmem:[%s3] sm:$0xf]
    %v833 = vld [vmem:[#allocation2] sm:$0x1]
    %835 = vset.pattern.permute.xlu0 0
    %836 = vperm.xlu0 %835, %v833
    %v837 = vpop.permute.xlu0 %836
    %v839 = vlaneseq
    %v840 = vshrl.u32 %v839, 7
    %v841 = vsub.s32 0, %v840
    %v842 = vrot.slane %v837, %v841
    %v844 = vlaneseq
    %v845 = vshrl.u32 %v844, 7
    %v846 = vsub.s32 0, %v845
    %v847 = vrot.slane %v832, %v846
    %v848 = vlaneseq
    %v849 = vshrl.u32 %v848, 7
    %v850 = vsub.s32 1, %v849
    %v851 = vrot.slane %v832, %v850
    %v852 = vlaneseq
    %v853 = vshrl.u32 %v852, 7
    %v854 = vsub.s32 2, %v853
    %v855 = vrot.slane %v832, %v854
    %v856 = vlaneseq
    %v857 = vshrl.u32 %v856, 7
    %v858 = vsub.s32 3, %v857
    %v859 = vrot.slane %v832, %v858
    %864 = vmatprep.subr.mxu0 %v765
    %865 = vmatpush1.xpose.msra.mxu0 %v764
    %866 = vmatprep.subr.mxu0 %v761
    %867 = vmatpush1.xpose.msra.mxu0 %v760
    %868 = vmatprep.subr.mxu0 %v757
    %869 = vmatpush1.xpose.msra.mxu0 %v756
    %870 = vmatprep.subr.mxu0 %v753
    %871 = vmatpush1.xpose.msra.mxu0 %v752
    %872 = vmatprep.subr.mxu0 %v749
    %873 = vmatpush1.xpose.msra.mxu0 %v748
    %874 = vmatprep.subr.mxu0 %v745
    %875 = vmatpush1.xpose.msra.mxu0 %v744
    %876 = vmatprep.subr.mxu0 %v741
    %877 = vmatpush1.xpose.msra.mxu0 %v740
    %878 = vmatprep.subr.mxu0 %v737
    %879 = vmatpush1.xpose.msra.mxu0 %v736
    %880 = vmatprep.subr.mxu0 %v733
    %881 = vmatpush1.xpose.msra.mxu0 %v732
    %882 = vmatprep.subr.mxu0 %v729
    %883 = vmatpush1.xpose.msra.mxu0 %v728
    %884 = vmatprep.subr.mxu0 %v725
    %885 = vmatpush1.xpose.msra.mxu0 %v724
    %886 = vmatprep.subr.mxu0 %v721
    %887 = vmatpush1.xpose.msra.mxu0 %v720
    %888 = vmatprep.subr.mxu0 %v717
    %889 = vmatpush1.xpose.msra.mxu0 %v716
    %890 = vmatprep.subr.mxu0 %v713
    %891 = vmatpush1.xpose.msra.mxu0 %v712
    %892 = vmatprep.subr.mxu0 %v709
    %893 = vmatpush1.xpose.msra.mxu0 %v708
    %894 = vmatprep.subr.mxu0 %v705
    %895 = vmatpush1.xpose.msra.mxu0 %v704
    %896 = vmatprep.subr.mxu0 %v829
    %897 = vmatpush2.xpose.msra.mxu0 %v828
    %898 = vmatprep.subr.mxu0 %v825
    %899 = vmatpush2.xpose.msra.mxu0 %v824
    %900 = vmatprep.subr.mxu0 %v821
    %901 = vmatpush2.xpose.msra.mxu0 %v820
    %902 = vmatprep.subr.mxu0 %v817
    %903 = vmatpush2.xpose.msra.mxu0 %v816
    %904 = vmatprep.subr.mxu0 %v813
    %905 = vmatpush2.xpose.msra.mxu0 %v812
    %906 = vmatprep.subr.mxu0 %v809
    %907 = vmatpush2.xpose.msra.mxu0 %v808
    %908 = vmatprep.subr.mxu0 %v805
    %909 = vmatpush2.xpose.msra.mxu0 %v804
    %910 = vmatprep.subr.mxu0 %v801
    %911 = vmatpush2.xpose.msra.mxu0 %v800
    %912 = vmatprep.subr.mxu0 %v797
    %913 = vmatpush2.xpose.msra.mxu0 %v796
    %914 = vmatprep.subr.mxu0 %v793
    %915 = vmatpush2.xpose.msra.mxu0 %v792
    %916 = vmatprep.subr.mxu0 %v789
    %917 = vmatpush2.xpose.msra.mxu0 %v788
    %918 = vmatprep.subr.mxu0 %v785
    %919 = vmatpush2.xpose.msra.mxu0 %v784
    %920 = vmatprep.subr.mxu0 %v781
    %921 = vmatpush2.xpose.msra.mxu0 %v780
    %922 = vmatprep.subr.mxu0 %v777
    %923 = vmatpush2.xpose.msra.mxu0 %v776
    %924 = vmatprep.subr.mxu0 %v773
    %925 = vmatpush2.xpose.msra.mxu0 %v772
    %926 = vmatprep.subr.mxu0 %v769
    %927 = vmatpush2.xpose.msra.mxu0 %v768
    %928 = vmatprep.mubr.f32.mxu0 %v851
    %929 = vmatmul.mubr.f32.gmra.mxu0 %v847
    %v930 = vpop.f32.mrf.mxu0
    %v931 = vadd.f32 %v842, %v930
    %v932 = vpop.f32.mrf.mxu0
    %v933 = vadd.f32 %v842, %v932
    %934 = vdwg.mxu0
    %935 = vmatprep.subr.mxu0 %v767
    %936 = vmatpush1.xpose.msra.mxu0 %v766
    %937 = vmatprep.subr.mxu0 %v763
    %938 = vmatpush1.xpose.msra.mxu0 %v762
    %939 = vmatprep.subr.mxu0 %v759
    %940 = vmatpush1.xpose.msra.mxu0 %v758
    %941 = vmatprep.subr.mxu0 %v755
    %942 = vmatpush1.xpose.msra.mxu0 %v754
    %943 = vmatprep.subr.mxu0 %v751
    %944 = vmatpush1.xpose.msra.mxu0 %v750
    %945 = vmatprep.subr.mxu0 %v747
    %946 = vmatpush1.xpose.msra.mxu0 %v746
    %947 = vmatprep.subr.mxu0 %v743
    %948 = vmatpush1.xpose.msra.mxu0 %v742
    %949 = vmatprep.subr.mxu0 %v739
    %950 = vmatpush1.xpose.msra.mxu0 %v738
    %951 = vmatprep.subr.mxu0 %v735
    %952 = vmatpush1.xpose.msra.mxu0 %v734
    %953 = vmatprep.subr.mxu0 %v731
    %954 = vmatpush1.xpose.msra.mxu0 %v730
    %955 = vmatprep.subr.mxu0 %v727
    %956 = vmatpush1.xpose.msra.mxu0 %v726
    %957 = vmatprep.subr.mxu0 %v723
    %958 = vmatpush1.xpose.msra.mxu0 %v722
    %959 = vmatprep.subr.mxu0 %v719
    %960 = vmatpush1.xpose.msra.mxu0 %v718
    %961 = vmatprep.subr.mxu0 %v715
    %962 = vmatpush1.xpose.msra.mxu0 %v714
    %963 = vmatprep.subr.mxu0 %v711
    %964 = vmatpush1.xpose.msra.mxu0 %v710
    %965 = vmatprep.subr.mxu0 %v707
    %966 = vmatpush1.xpose.msra.mxu0 %v706
    %967 = vmatprep.subr.mxu0 %v831
    %968 = vmatpush2.xpose.msra.mxu0 %v830
    %969 = vmatprep.subr.mxu0 %v827
    %970 = vmatpush2.xpose.msra.mxu0 %v826
    %971 = vmatprep.subr.mxu0 %v823
    %972 = vmatpush2.xpose.msra.mxu0 %v822
    %973 = vmatprep.subr.mxu0 %v819
    %974 = vmatpush2.xpose.msra.mxu0 %v818
    %975 = vmatprep.subr.mxu0 %v815
    %976 = vmatpush2.xpose.msra.mxu0 %v814
    %977 = vmatprep.subr.mxu0 %v811
    %978 = vmatpush2.xpose.msra.mxu0 %v810
    %979 = vmatprep.subr.mxu0 %v807
    %980 = vmatpush2.xpose.msra.mxu0 %v806
    %981 = vmatprep.subr.mxu0 %v803
    %982 = vmatpush2.xpose.msra.mxu0 %v802
    %983 = vmatprep.subr.mxu0 %v799
    %984 = vmatpush2.xpose.msra.mxu0 %v798
    %985 = vmatprep.subr.mxu0 %v795
    %986 = vmatpush2.xpose.msra.mxu0 %v794
    %987 = vmatprep.subr.mxu0 %v791
    %988 = vmatpush2.xpose.msra.mxu0 %v790
    %989 = vmatprep.subr.mxu0 %v787
    %990 = vmatpush2.xpose.msra.mxu0 %v786
    %991 = vmatprep.subr.mxu0 %v783
    %992 = vmatpush2.xpose.msra.mxu0 %v782
    %993 = vmatprep.subr.mxu0 %v779
    %994 = vmatpush2.xpose.msra.mxu0 %v778
    %995 = vmatprep.subr.mxu0 %v775
    %996 = vmatpush2.xpose.msra.mxu0 %v774
    %997 = vmatprep.subr.mxu0 %v771
    %998 = vmatpush2.xpose.msra.mxu0 %v770
    %999 = vmatprep.mubr.f32.mxu0 %v859
    %1000 = vmatmul.mubr.f32.gmra.mxu0 %v855
    %v1001 = vpop.f32.mrf.mxu0
    %v1002 = vadd.f32 %v931, %v1001
    %v1003 = vpop.f32.mrf.mxu0
    %v1004 = vadd.f32 %v933, %v1003
    %1005 = vdwg.mxu0
    %v1008 = vcombine.low %v1002, %v1004
    %v1010 = vunpack.c.l.s4 1966171168
    %v1011 = vunpack.c.0.s8 %v1010
    %v1012 = vlaneseq
    %v1013 = vshrl.u32 %v1012, 7
    %v1014 = vsub.s32 %v1011, %v1013
    %v1015 = vrot.slane %v1008, %v1014
    %v1017 = vunpack.c.l.s4 1966171168
    %v1018 = vunpack.c.0.s8 %v1017
    %v1019 = vlaneseq
    %v1020 = vshrl.u32 %v1019, 7
    %v1021 = vsub.s32 %v1018, %v1020
    %v1022 = vrot.slane %v1015, %v1021
    %v1024 = vlaneseq
    %vm1025 = vcmp.ge.s32.totalorder %v1024, 0
    %vm1026 = vcmp.lt.s32.totalorder %v1024, 256
    %vm1027 = vmand %vm1025, %vm1026
    %1028 = vst.msk [vmem:[#allocation3] sm:$0x3] %vm1027, %v1022
    // Predicated region
    $region22: #{tpu_custom_call.1} parent=1 // pred_check
      _
    $region23: #{tpu_custom_call.1} parent=1 // pred_check_branch
      %1030 = sbr.rel (0) target = $region25
    $region24: #{tpu_custom_call.1} parent=1 // pred_region
      %s1032 = ssub.s32 32, 32
      %1033 = vsyncadd [#allocation4], %s1032
      %s1035 = sshll.u32 [#allocation3], 4
      %s1036 = int_to_ptr.vmem [resolvable:$true] %s1035
      %1038 = dma.vmem_to_hbm [thread:$0]  %s1036, 32, %s5, [#allocation4]
    $region25: #{tpu_custom_call.1} parent=1 // pred_fallthru
      _
    // Predicated region
    $region26: #{tpu_custom_call.1} parent=1 // pred_check
      _
    $region27: #{tpu_custom_call.1} parent=1 // pred_check_branch
      %1040 = sbr.rel (0) target = $region29
    $region28: #{tpu_custom_call.1} parent=1 // pred_region
      %1041 = dma.done [#allocation4], 32
    $region29: #{tpu_custom_call.1} parent=1 // pred_fallthru
      _
    %1042 = vsyncpa [#allocation4], 1

</llo_original>
